<compile_context>
chip_gen: v7x
topology: tpu7x:2x2x1
jax: 0.10.0
libtpu: 0.0.40
codegen_flags: <defaults>
</compile_context>

<pallas_src>
import functools

import numpy as np
import jax
import jax.numpy as jnp
from jax import lax
from jax.experimental import pallas as pl
from jax.experimental.pallas import tpu as pltpu


def _elu(v):
    # clamp the exp argument so the unselected branch never overflows
    return jnp.where(v > 0, v, jnp.exp(jnp.minimum(v, 0.0)) - 1.0)


# ------------------------------- kernels ----------------------------------- #

def _stats1_kernel(x_ref, wb1_ref, stats_ref):
    """conv1 on one M-tile; emit per-tile per-(h,c) sum and sum-of-squares."""
    y1 = jnp.dot(x_ref[...], wb1_ref[...], preferred_element_type=jnp.float32)
    s = jnp.sum(y1, axis=0, keepdims=True)
    ss = jnp.sum(y1 * y1, axis=0, keepdims=True)
    stats_ref[...] = jnp.concatenate([s, ss], axis=0)[None]


def _mid_kernel(x_ref, wb1_ref, a1_ref, b1_ref, wb2_ref, y2_ref, stats_ref):
    """conv1 -> BN1 (precomputed scale/shift) -> ELU -> conv2; emit y2 + BN2 partials."""
    y1 = jnp.dot(x_ref[...], wb1_ref[...], preferred_element_type=jnp.float32)
    s1 = _elu(y1 * a1_ref[...] + b1_ref[...])
    y2 = jnp.dot(s1, wb2_ref[...], preferred_element_type=jnp.float32)
    y2_ref[...] = y2
    s = jnp.sum(y2, axis=0, keepdims=True)
    ss = jnp.sum(y2 * y2, axis=0, keepdims=True)
    stats_ref[...] = jnp.concatenate([s, ss], axis=0)[None]


def _out_kernel(y2_ref, x_ref, r_ref, a2_ref, b2_ref, o_ref):
    """BN2 (precomputed scale/shift) + channel-padded residual (x @ R) + ELU."""
    resid = jnp.dot(x_ref[...], r_ref[...], preferred_element_type=jnp.float32)
    o_ref[...] = _elu(y2_ref[...] * a2_ref[...] + b2_ref[...] + resid)


# ------------------------------ wrapper ------------------------------------ #

def _banded_conv_weight(w, H, dil, pad):
    """(KT, Ci, Co) conv taps -> banded (H*Ci, H*Co) matmul weight (time padding folded in)."""
    KT, Ci, Co = w.shape
    msk = np.zeros((KT, H, H), np.float32)
    for t in range(KT):
        for ho in range(H):
            hi = ho + t * dil - pad
            if 0 <= hi < H:
                msk[t, hi, ho] = 1.0
    wb = jnp.einsum("tij,tcd->icjd", jnp.asarray(msk), w.astype(jnp.float32))
    return wb.reshape(H * Ci, H * Co)


def _residual_embed(H, Cin, Cout):
    """Constant (H*Cin, H*Cout) matrix that places Cin channels at the center of Cout."""
    npad = (Cout - Cin) // 2
    r = np.zeros((H * Cin, H * Cout), np.float32)
    for h in range(H):
        for ci in range(Cin):
            r[h * Cin + ci, h * Cout + npad + ci] = 1.0
    return jnp.asarray(r)


def _bn_scale_shift(partials, gamma, beta, count, H, C, eps):
    """Combine per-tile (2, H*C) partials -> lane-layout (1, H*C) BN scale / shift."""
    s = partials.sum(axis=0).reshape(2, H, C).sum(axis=1)      # (2, C)
    mean = s[0] / count
    var = s[1] / count - mean * mean                           # biased (train-mode) variance
    a = gamma.reshape(-1) * lax.rsqrt(var + eps)
    b = beta.reshape(-1) - mean * a
    return jnp.tile(a, H).reshape(1, H * C), jnp.tile(b, H).reshape(1, H * C)


def _pick_tile_m(M, target=512):
    cands = [t for t in range(8, min(M, target) + 1, 8) if M % t == 0]
    return max(cands) if cands else M


@functools.partial(jax.jit,
                   static_argnames=("dilation", "filter_time_length", "eps", "tile_m"))
def residual_block(x_nchw, params, *, dilation, filter_time_length=3, eps=1e-4,
                   tile_m=None):
    d0 = int(dilation[0])                       # kernel width is 1 -> dilation[1] irrelevant
    time_padding = (filter_time_length - 1) * d0
    assert time_padding % 2 == 0
    pad = time_padding // 2

    N, Cin, H, W = x_nchw.shape
    Cout = params["w1"].shape[-1]
    assert (Cout - Cin) % 2 == 0
    M = N * W
    HCI, HCO = H * Cin, H * Cout

    tm = _pick_tile_m(M) if tile_m is None else int(tile_m)
    assert M % tm == 0 and (tm % 8 == 0 or tm == M)
    nt = M // tm

    # NCHW -> (N, W, H, C) -> lane-dense rows (M, H*Cin).  (Single small XLA transpose;
    # the time padding is folded into the banded weights, so no jnp.pad pass.)
    x_rows = jnp.transpose(x_nchw, (0, 3, 2, 1)).reshape(M, HCI).astype(jnp.float32)

    wb1 = _banded_conv_weight(params["w1"], H, d0, pad)        # (H*Cin,  H*Cout)
    wb2 = _banded_conv_weight(params["w2"], H, d0, pad)        # (H*Cout, H*Cout)
    r_embed = _residual_embed(H, Cin, Cout)                    # (H*Cin,  H*Cout)
    # conv biases b1/b2 intentionally unused: train-mode BN mean subtraction cancels them.

    cp = pltpu.CompilerParams(dimension_semantics=("parallel",),
                              vmem_limit_bytes=32 * 1024 * 1024)

    x_spec = pl.BlockSpec((tm, HCI), lambda i: (i, 0))
    y_spec = pl.BlockSpec((tm, HCO), lambda i: (i, 0))
    stats_spec = pl.BlockSpec((1, 2, HCO), lambda i: (i, 0, 0))
    full2 = lambda shape: pl.BlockSpec(shape, lambda i: (0, 0))

    # ---- pass 1: conv1 -> BN1 statistics (per-tile partials) ----
    p1 = pl.pallas_call(
        _stats1_kernel,
        grid=(nt,),
        in_specs=[x_spec, full2((HCI, HCO))],
        out_specs=stats_spec,
        out_shape=jax.ShapeDtypeStruct((nt, 2, HCO), jnp.float32),
        compiler_params=cp,
    )(x_rows, wb1)
    a1, b1 = _bn_scale_shift(p1, params["g1"], params["be1"], M * H, H, Cout, eps)

    # ---- pass 2: conv1 -> BN1 -> ELU -> conv2, plus BN2 statistics ----
    y2, p2 = pl.pallas_call(
        _mid_kernel,
        grid=(nt,),
        in_specs=[x_spec, full2((HCI, HCO)), full2((1, HCO)), full2((1, HCO)),
                  full2((HCO, HCO))],
        out_specs=(y_spec, stats_spec),
        out_shape=(jax.ShapeDtypeStruct((M, HCO), jnp.float32),
                   jax.ShapeDtypeStruct((nt, 2, HCO), jnp.float32)),
        compiler_params=cp,
    )(x_rows, wb1, a1, b1, wb2)
    a2, b2 = _bn_scale_shift(p2, params["g2"], params["be2"], M * H, H, Cout, eps)

    # ---- pass 3: BN2 + channel-padded residual + ELU ----
    out_rows = pl.pallas_call(
        _out_kernel,
        grid=(nt,),
        in_specs=[y_spec, x_spec, full2((HCI, HCO)), full2((1, HCO)), full2((1, HCO))],
        out_specs=y_spec,
        out_shape=jax.ShapeDtypeStruct((M, HCO), jnp.float32),
        compiler_params=cp,
    )(y2, x_rows, r_embed, a2, b2)

    # rows (M, H*Cout) -> (N, W, H, Cout) -> NCHW
    return jnp.transpose(out_rows.reshape(N, W, H, Cout), (0, 3, 2, 1))


# ------------------------------ reference ---------------------------------- #

def reference_forward(x, params, *, dilation, filter_time_length=3, eps=1e-4):
    """Pure-JAX reference mirroring the PyTorch forward (training-mode BN)."""
    d0 = int(dilation[0])
    pad = (filter_time_length - 1) * d0 // 2
    Cin = x.shape[1]
    Cout = params["w1"].shape[-1]

    def conv(v, w, b):  # w: (KT, Cin, Cout) -> OIHW
        w_oihw = jnp.transpose(w, (2, 1, 0))[..., None]
        y = lax.conv_general_dilated(v, w_oihw, window_strides=(1, 1),
                                     padding=((pad, pad), (0, 0)),
                                     rhs_dilation=(d0, 1),
                                     dimension_numbers=("NCHW", "OIHW", "NCHW"))
        return y + b.reshape(1, -1, 1, 1)

    def bn(v, g, b):
        mu = v.mean(axis=(0, 2, 3), keepdims=True)
        var = ((v - mu) ** 2).mean(axis=(0, 2, 3), keepdims=True)
        return (v - mu) / jnp.sqrt(var + eps) * g.reshape(1, -1, 1, 1) + b.reshape(1, -1, 1, 1)

    elu = lambda v: jnp.where(v > 0, v, jnp.exp(jnp.minimum(v, 0.0)) - 1.0)

    s1 = elu(bn(conv(x, params["w1"], params["b1"]), params["g1"], params["be1"]))
    s2 = bn(conv(s1, params["w2"], params["b2"]), params["g2"], params["be2"])
    npad = (Cout - Cin) // 2
    xp = jnp.pad(x, ((0, 0), (npad, npad), (0, 0), (0, 0)))
    return elu(xp + s2)


if __name__ == "__main__":
    N, Cin, H, W = 2, 4, 16, 16
    Cout, KT = 8, 3
    dilation = (2, 1)

    key = jax.random.PRNGKey(0)
    ks = jax.random.split(key, 10)
    params = {
        "w1":  0.3 * jax.random.normal(ks[0], (KT, Cin, Cout), jnp.float32),
        "b1":  0.1 * jax.random.normal(ks[1], (1, Cout), jnp.float32),
        "g1":  1.0 + 0.1 * jax.random.normal(ks[2], (1, Cout), jnp.float32),
        "be1": 0.1 * jax.random.normal(ks[3], (1, Cout), jnp.float32),
        "w2":  0.3 * jax.random.normal(ks[4], (KT, Cout, Cout), jnp.float32),
        "b2":  0.1 * jax.random.normal(ks[5], (1, Cout), jnp.float32),
        "g2":  1.0 + 0.1 * jax.random.normal(ks[6], (1, Cout), jnp.float32),
        "be2": 0.1 * jax.random.normal(ks[7], (1, Cout), jnp.float32),
    }
    x = jax.random.normal(ks[8], (N, Cin, H, W), jnp.float32)

    # tile_m=8 -> grid of 4 M-tiles: exercises the streaming-BN partials and the
    # "parallel" tiling even at this tiny demo size (auto-pick uses larger tiles).
    out = residual_block(x, params, dilation=dilation, tile_m=8)
    out = jax.block_until_ready(out)
    assert out.shape == (N, Cout, H, W), out.shape

    ref = reference_forward(x, params, dilation=dilation)
    err = float(jnp.max(jnp.abs(out - ref)))
    assert err < 5e-2, f"max abs err {err}"

    print("KERNEL_OK")
</pallas_src>

<mosaic_0001>
module attributes {stable_mosaic.version = 11 : i64} {
  func.func @_stats1_kernel(%arg0: i32, %arg1: memref<8x64xf32, #tpu.memory_space<vmem>>, %arg2: memref<64x128xf32, #tpu.memory_space<vmem>>, %arg3: memref<1x2x128xf32, #tpu.memory_space<vmem>>) attributes {dimension_semantics = [#tpu.dimension_semantics<parallel>], iteration_bounds = array<i64: 4>, scalar_prefetch = 0 : i64, scratch_operands = 0 : i64, tpu.core_type = #tpu.core_type<tc>, window_params = [{transform_indices = @transform_0, window_bounds = array<i64: 8, 64>}, {pipeline_mode = #tpu.pipeline_mode<synchronous>, transform_indices = @transform_1, window_bounds = array<i64: 64, 128>}, {transform_indices = @transform_2, window_bounds = array<i64: 1, 2, 128>}]} {
    %c0 = arith.constant 0 : index
    %c0_0 = arith.constant 0 : index
    %0 = vector.load %arg1[%c0, %c0_0] : memref<8x64xf32, #tpu.memory_space<vmem>>, vector<8x64xf32>
    %c0_1 = arith.constant 0 : index
    %c0_2 = arith.constant 0 : index
    %1 = vector.load %arg2[%c0_1, %c0_2] : memref<64x128xf32, #tpu.memory_space<vmem>>, vector<64x128xf32>
    %cst = arith.constant dense<0.000000e+00> : vector<8x128xf32>
    %2 = tpu.matmul %0, %1, %cst {dimension_numbers = #tpu.dot_dimension_numbers<[1], [0], [0], [1], [0, 0, 1, 1], [], []>} : vector<8x64xf32>, vector<64x128xf32>, vector<8x128xf32> -> vector<8x128xf32>
    %cst_3 = arith.constant dense<0.000000e+00> : vector<128xf32>
    %3 = vector.multi_reduction <add>, %2, %cst_3 [0] : vector<8x128xf32> to vector<128xf32>
    %4 = vector.shape_cast %3 : vector<128xf32> to vector<1x128xf32>
    %5 = arith.mulf %2, %2 : vector<8x128xf32>
    %cst_4 = arith.constant dense<0.000000e+00> : vector<128xf32>
    %6 = vector.multi_reduction <add>, %5, %cst_4 [0] : vector<8x128xf32> to vector<128xf32>
    %7 = vector.shape_cast %6 : vector<128xf32> to vector<1x128xf32>
    %8 = tpu.concatenate %4, %7 in 0 : vector<1x128xf32>, vector<1x128xf32> -> vector<2x128xf32>
    %9 = vector.shape_cast %8 : vector<2x128xf32> to vector<1x2x128xf32>
    %c0_5 = arith.constant 0 : index
    %c0_6 = arith.constant 0 : index
    %c0_7 = arith.constant 0 : index
    %10 = vector.load %arg3[%c0_5, %c0_6, %c0_7] : memref<1x2x128xf32, #tpu.memory_space<vmem>>, vector<1x2x128xf32>
    tpu.vector_store %arg3[%c0_5, %c0_6, %c0_7], %9 {strides = array<i32>} : memref<1x2x128xf32, #tpu.memory_space<vmem>>, vector<1x2x128xf32>,
    return
  }
  func.func @transform_0(%arg0: i32) -> (i32, i32) {
    %c0_i32 = arith.constant 0 : i32
    %c0_i32_0 = arith.constant 0 : i32
    return %arg0, %c0_i32 : i32, i32
  }
  func.func @transform_1(%arg0: i32) -> (i32, i32) {
    %c0_i32 = arith.constant 0 : i32
    %c0_i32_0 = arith.constant 0 : i32
    %c0_i32_1 = arith.constant 0 : i32
    return %c0_i32, %c0_i32_0 : i32, i32
  }
  func.func @transform_2(%arg0: i32) -> (i32, i32, i32) {
    %c0_i32 = arith.constant 0 : i32
    %c0_i32_0 = arith.constant 0 : i32
    %c0_i32_1 = arith.constant 0 : i32
    return %arg0, %c0_i32, %c0_i32_0 : i32, i32, i32
  }
}

module attributes {stable_mosaic.version = 11 : i64} {
  func.func @_mid_kernel(%arg0: i32, %arg1: memref<8x64xf32, #tpu.memory_space<vmem>>, %arg2: memref<64x128xf32, #tpu.memory_space<vmem>>, %arg3: memref<1x128xf32, #tpu.memory_space<vmem>>, %arg4: memref<1x128xf32, #tpu.memory_space<vmem>>, %arg5: memref<128x128xf32, #tpu.memory_space<vmem>>, %arg6: memref<8x128xf32, #tpu.memory_space<vmem>>, %arg7: memref<1x2x128xf32, #tpu.memory_space<vmem>>) attributes {dimension_semantics = [#tpu.dimension_semantics<parallel>], iteration_bounds = array<i64: 4>, scalar_prefetch = 0 : i64, scratch_operands = 0 : i64, tpu.core_type = #tpu.core_type<tc>, window_params = [{transform_indices = @transform_0, window_bounds = array<i64: 8, 64>}, {pipeline_mode = #tpu.pipeline_mode<synchronous>, transform_indices = @transform_1, window_bounds = array<i64: 64, 128>}, {pipeline_mode = #tpu.pipeline_mode<synchronous>, transform_indices = @transform_2, window_bounds = array<i64: 1, 128>}, {pipeline_mode = #tpu.pipeline_mode<synchronous>, transform_indices = @transform_3, window_bounds = array<i64: 1, 128>}, {pipeline_mode = #tpu.pipeline_mode<synchronous>, transform_indices = @transform_4, window_bounds = array<i64: 128, 128>}, {transform_indices = @transform_5, window_bounds = array<i64: 8, 128>}, {transform_indices = @transform_6, window_bounds = array<i64: 1, 2, 128>}]} {
    %c0 = arith.constant 0 : index
    %c0_0 = arith.constant 0 : index
    %0 = vector.load %arg1[%c0, %c0_0] : memref<8x64xf32, #tpu.memory_space<vmem>>, vector<8x64xf32>
    %c0_1 = arith.constant 0 : index
    %c0_2 = arith.constant 0 : index
    %1 = vector.load %arg2[%c0_1, %c0_2] : memref<64x128xf32, #tpu.memory_space<vmem>>, vector<64x128xf32>
    %cst = arith.constant dense<0.000000e+00> : vector<8x128xf32>
    %2 = tpu.matmul %0, %1, %cst {dimension_numbers = #tpu.dot_dimension_numbers<[1], [0], [0], [1], [0, 0, 1, 1], [], []>} : vector<8x64xf32>, vector<64x128xf32>, vector<8x128xf32> -> vector<8x128xf32>
    %c0_3 = arith.constant 0 : index
    %c0_4 = arith.constant 0 : index
    %3 = vector.load %arg3[%c0_3, %c0_4] : memref<1x128xf32, #tpu.memory_space<vmem>>, vector<1x128xf32>
    %4 = vector.broadcast %3 : vector<1x128xf32> to vector<8x128xf32>
    %5 = arith.mulf %2, %4 : vector<8x128xf32>
    %c0_5 = arith.constant 0 : index
    %c0_6 = arith.constant 0 : index
    %6 = vector.load %arg4[%c0_5, %c0_6] : memref<1x128xf32, #tpu.memory_space<vmem>>, vector<1x128xf32>
    %7 = vector.broadcast %6 : vector<1x128xf32> to vector<8x128xf32>
    %8 = arith.addf %5, %7 : vector<8x128xf32>
    %cst_7 = arith.constant 0.000000e+00 : f32
    %9 = vector.broadcast %cst_7 : f32 to vector<8x128xf32>
    %10 = arith.cmpf ogt, %8, %9 : vector<8x128xf32>
    %cst_8 = arith.constant 0.000000e+00 : f32
    %11 = vector.broadcast %cst_8 : f32 to vector<8x128xf32>
    %12 = arith.minimumf %8, %11 : vector<8x128xf32>
    %13 = math.exp %12 : vector<8x128xf32>
    %cst_9 = arith.constant 1.000000e+00 : f32
    %14 = vector.broadcast %cst_9 : f32 to vector<8x128xf32>
    %15 = arith.subf %13, %14 : vector<8x128xf32>
    %16 = arith.select %10, %8, %15 : vector<8x128xi1>, vector<8x128xf32>
    %c0_10 = arith.constant 0 : index
    %c0_11 = arith.constant 0 : index
    %17 = vector.load %arg5[%c0_10, %c0_11] : memref<128x128xf32, #tpu.memory_space<vmem>>, vector<128x128xf32>
    %cst_12 = arith.constant dense<0.000000e+00> : vector<8x128xf32>
    %18 = tpu.matmul %16, %17, %cst_12 {dimension_numbers = #tpu.dot_dimension_numbers<[1], [0], [0], [1], [0, 0, 1, 1], [], []>} : vector<8x128xf32>, vector<128x128xf32>, vector<8x128xf32> -> vector<8x128xf32>
    %c0_13 = arith.constant 0 : index
    %c0_14 = arith.constant 0 : index
    %19 = vector.load %arg6[%c0_13, %c0_14] : memref<8x128xf32, #tpu.memory_space<vmem>>, vector<8x128xf32>
    tpu.vector_store %arg6[%c0_13, %c0_14], %18 {strides = array<i32>} : memref<8x128xf32, #tpu.memory_space<vmem>>, vector<8x128xf32>,
    %cst_15 = arith.constant dense<0.000000e+00> : vector<128xf32>
    %20 = vector.multi_reduction <add>, %18, %cst_15 [0] : vector<8x128xf32> to vector<128xf32>
    %21 = vector.shape_cast %20 : vector<128xf32> to vector<1x128xf32>
    %22 = arith.mulf %18, %18 : vector<8x128xf32>
    %cst_16 = arith.constant dense<0.000000e+00> : vector<128xf32>
    %23 = vector.multi_reduction <add>, %22, %cst_16 [0] : vector<8x128xf32> to vector<128xf32>
    %24 = vector.shape_cast %23 : vector<128xf32> to vector<1x128xf32>
    %25 = tpu.concatenate %21, %24 in 0 : vector<1x128xf32>, vector<1x128xf32> -> vector<2x128xf32>
    %26 = vector.shape_cast %25 : vector<2x128xf32> to vector<1x2x128xf32>
    %c0_17 = arith.constant 0 : index
    %c0_18 = arith.constant 0 : index
    %c0_19 = arith.constant 0 : index
    %27 = vector.load %arg7[%c0_17, %c0_18, %c0_19] : memref<1x2x128xf32, #tpu.memory_space<vmem>>, vector<1x2x128xf32>
    tpu.vector_store %arg7[%c0_17, %c0_18, %c0_19], %26 {strides = array<i32>} : memref<1x2x128xf32, #tpu.memory_space<vmem>>, vector<1x2x128xf32>,
    return
  }
  func.func @transform_0(%arg0: i32) -> (i32, i32) {
    %c0_i32 = arith.constant 0 : i32
    %c0_i32_0 = arith.constant 0 : i32
    return %arg0, %c0_i32 : i32, i32
  }
  func.func @transform_1(%arg0: i32) -> (i32, i32) {
    %c0_i32 = arith.constant 0 : i32
    %c0_i32_0 = arith.constant 0 : i32
    %c0_i32_1 = arith.constant 0 : i32
    return %c0_i32, %c0_i32_0 : i32, i32
  }
  func.func @transform_2(%arg0: i32) -> (i32, i32) {
    %c0_i32 = arith.constant 0 : i32
    %c0_i32_0 = arith.constant 0 : i32
    %c0_i32_1 = arith.constant 0 : i32
    return %c0_i32, %c0_i32_0 : i32, i32
  }
  func.func @transform_3(%arg0: i32) -> (i32, i32) {
    %c0_i32 = arith.constant 0 : i32
    %c0_i32_0 = arith.constant 0 : i32
    %c0_i32_1 = arith.constant 0 : i32
    return %c0_i32, %c0_i32_0 : i32, i32
  }
  func.func @transform_4(%arg0: i32) -> (i32, i32) {
    %c0_i32 = arith.constant 0 : i32
    %c0_i32_0 = arith.constant 0 : i32
    %c0_i32_1 = arith.constant 0 : i32
    return %c0_i32, %c0_i32_0 : i32, i32
  }
  func.func @transform_5(%arg0: i32) -> (i32, i32) {
    %c0_i32 = arith.constant 0 : i32
    %c0_i32_0 = arith.constant 0 : i32
    return %arg0, %c0_i32 : i32, i32
  }
  func.func @transform_6(%arg0: i32) -> (i32, i32, i32) {
    %c0_i32 = arith.constant 0 : i32
    %c0_i32_0 = arith.constant 0 : i32
    %c0_i32_1 = arith.constant 0 : i32
    return %arg0, %c0_i32, %c0_i32_0 : i32, i32, i32
  }
}

module attributes {stable_mosaic.version = 11 : i64} {
  func.func @_out_kernel(%arg0: i32, %arg1: memref<8x128xf32, #tpu.memory_space<vmem>>, %arg2: memref<8x64xf32, #tpu.memory_space<vmem>>, %arg3: memref<64x128xf32, #tpu.memory_space<vmem>>, %arg4: memref<1x128xf32, #tpu.memory_space<vmem>>, %arg5: memref<1x128xf32, #tpu.memory_space<vmem>>, %arg6: memref<8x128xf32, #tpu.memory_space<vmem>>) attributes {dimension_semantics = [#tpu.dimension_semantics<parallel>], iteration_bounds = array<i64: 4>, scalar_prefetch = 0 : i64, scratch_operands = 0 : i64, tpu.core_type = #tpu.core_type<tc>, window_params = [{transform_indices = @transform_0, window_bounds = array<i64: 8, 128>}, {transform_indices = @transform_1, window_bounds = array<i64: 8, 64>}, {pipeline_mode = #tpu.pipeline_mode<synchronous>, transform_indices = @transform_2, window_bounds = array<i64: 64, 128>}, {pipeline_mode = #tpu.pipeline_mode<synchronous>, transform_indices = @transform_3, window_bounds = array<i64: 1, 128>}, {pipeline_mode = #tpu.pipeline_mode<synchronous>, transform_indices = @transform_4, window_bounds = array<i64: 1, 128>}, {transform_indices = @transform_5, window_bounds = array<i64: 8, 128>}]} {
    %c0 = arith.constant 0 : index
    %c0_0 = arith.constant 0 : index
    %0 = vector.load %arg2[%c0, %c0_0] : memref<8x64xf32, #tpu.memory_space<vmem>>, vector<8x64xf32>
    %c0_1 = arith.constant 0 : index
    %c0_2 = arith.constant 0 : index
    %1 = vector.load %arg3[%c0_1, %c0_2] : memref<64x128xf32, #tpu.memory_space<vmem>>, vector<64x128xf32>
    %cst = arith.constant dense<0.000000e+00> : vector<8x128xf32>
    %2 = tpu.matmul %0, %1, %cst {dimension_numbers = #tpu.dot_dimension_numbers<[1], [0], [0], [1], [0, 0, 1, 1], [], []>} : vector<8x64xf32>, vector<64x128xf32>, vector<8x128xf32> -> vector<8x128xf32>
    %c0_3 = arith.constant 0 : index
    %c0_4 = arith.constant 0 : index
    %3 = vector.load %arg1[%c0_3, %c0_4] : memref<8x128xf32, #tpu.memory_space<vmem>>, vector<8x128xf32>
    %c0_5 = arith.constant 0 : index
    %c0_6 = arith.constant 0 : index
    %4 = vector.load %arg4[%c0_5, %c0_6] : memref<1x128xf32, #tpu.memory_space<vmem>>, vector<1x128xf32>
    %5 = vector.broadcast %4 : vector<1x128xf32> to vector<8x128xf32>
    %6 = arith.mulf %3, %5 : vector<8x128xf32>
    %c0_7 = arith.constant 0 : index
    %c0_8 = arith.constant 0 : index
    %7 = vector.load %arg5[%c0_7, %c0_8] : memref<1x128xf32, #tpu.memory_space<vmem>>, vector<1x128xf32>
    %8 = vector.broadcast %7 : vector<1x128xf32> to vector<8x128xf32>
    %9 = arith.addf %6, %8 : vector<8x128xf32>
    %10 = arith.addf %9, %2 : vector<8x128xf32>
    %cst_9 = arith.constant 0.000000e+00 : f32
    %11 = vector.broadcast %cst_9 : f32 to vector<8x128xf32>
    %12 = arith.cmpf ogt, %10, %11 : vector<8x128xf32>
    %cst_10 = arith.constant 0.000000e+00 : f32
    %13 = vector.broadcast %cst_10 : f32 to vector<8x128xf32>
    %14 = arith.minimumf %10, %13 : vector<8x128xf32>
    %15 = math.exp %14 : vector<8x128xf32>
    %cst_11 = arith.constant 1.000000e+00 : f32
    %16 = vector.broadcast %cst_11 : f32 to vector<8x128xf32>
    %17 = arith.subf %15, %16 : vector<8x128xf32>
    %18 = arith.select %12, %10, %17 : vector<8x128xi1>, vector<8x128xf32>
    %c0_12 = arith.constant 0 : index
    %c0_13 = arith.constant 0 : index
    %19 = vector.load %arg6[%c0_12, %c0_13] : memref<8x128xf32, #tpu.memory_space<vmem>>, vector<8x128xf32>
    tpu.vector_store %arg6[%c0_12, %c0_13], %18 {strides = array<i32>} : memref<8x128xf32, #tpu.memory_space<vmem>>, vector<8x128xf32>,
    return
  }
  func.func @transform_0(%arg0: i32) -> (i32, i32) {
    %c0_i32 = arith.constant 0 : i32
    %c0_i32_0 = arith.constant 0 : i32
    return %arg0, %c0_i32 : i32, i32
  }
  func.func @transform_1(%arg0: i32) -> (i32, i32) {
    %c0_i32 = arith.constant 0 : i32
    %c0_i32_0 = arith.constant 0 : i32
    return %arg0, %c0_i32 : i32, i32
  }
  func.func @transform_2(%arg0: i32) -> (i32, i32) {
    %c0_i32 = arith.constant 0 : i32
    %c0_i32_0 = arith.constant 0 : i32
    %c0_i32_1 = arith.constant 0 : i32
    return %c0_i32, %c0_i32_0 : i32, i32
  }
  func.func @transform_3(%arg0: i32) -> (i32, i32) {
    %c0_i32 = arith.constant 0 : i32
    %c0_i32_0 = arith.constant 0 : i32
    %c0_i32_1 = arith.constant 0 : i32
    return %c0_i32, %c0_i32_0 : i32, i32
  }
  func.func @transform_4(%arg0: i32) -> (i32, i32) {
    %c0_i32 = arith.constant 0 : i32
    %c0_i32_0 = arith.constant 0 : i32
    %c0_i32_1 = arith.constant 0 : i32
    return %c0_i32, %c0_i32_0 : i32, i32
  }
  func.func @transform_5(%arg0: i32) -> (i32, i32) {
    %c0_i32 = arith.constant 0 : i32
    %c0_i32_0 = arith.constant 0 : i32
    return %arg0, %c0_i32 : i32, i32
  }
}

</mosaic_0001>

<llo_original>
// kernel: tile.23
$region0: #{tile.23}
  #allocation0 [shape = 's32[1]{0}', space=sflag, size = 0x4, scoped, tag = 'scoped memory for tile.23']
  %s0 = inlined_call_operand.vmem [shape: f32[8], index: 0, kind: input, shape index: {}]
  %s1 = inlined_call_operand.vmem [shape: f32[16,8], index: 1, kind: output, shape index: {}]
  // Predicated region
  $region2: #{tile.23} parent=0 // pred_check
    _
  $region3: #{tile.23} parent=0 // pred_check_branch
    %3 = sbr.rel (0) target = $region5
  $region4: #{tile.23} parent=0 // pred_region
    _
  $region5: #{tile.23} parent=0 // pred_fallthru
    _
  %v4 = vld [vmem:[%s0] ss:$0 sm:$0xff]
  %5 = vst [vmem:[%s1] sm:$0xff] %v4
  %s6 = scalar_lea.vmem %s1, 8
  %7 = vst [vmem:[%s6] sm:$0xff] %v4

// kernel: tile.24
$region0: #{tile.24}
  %s0 = inlined_call_operand.vmem [shape: f32[16,8], index: 0, kind: input, shape index: {}]
  %s1 = inlined_call_operand.vmem [shape: f32[1,128], index: 1, kind: output, shape index: {}]
  $region1: #{tile.24} parent=0
    #allocation0 [shape = 'u8[4096]{0}', space=vmem, size = 0x1000, scoped, tag = 'scoped mem for output reshape']
    %v2 = vld [vmem:[%s0] sm:$0x1]
    %vm3 = vcmask 64512
    %4 = vst.msk [vmem:[#allocation0] sm:$0x1] %vm3, %v2
    %s5 = scalar_lea.vmem %s0, 15
    %v6 = vld [vmem:[%s5] sm:$0x1]
    %7 = vrot.lane.b32.xlu0 %v6, 120
    %v8 = vpop.permute.xlu0 %7
    %vm9 = vcmask 1048512
    %10 = vst.msk [vmem:[#allocation0] sm:$0x1] %vm9, %v8
    %s11 = scalar_lea.vmem %s0, 14
    %v12 = vld [vmem:[%s11] sm:$0x1]
    %13 = vrot.lane.b32.xlu0 %v12, 112
    %v14 = vpop.permute.xlu0 %13
    %vm15 = vcmask 982912
    %16 = vst.msk [vmem:[#allocation0] sm:$0x1] %vm15, %v14
    %s17 = scalar_lea.vmem %s0, 13
    %v18 = vld [vmem:[%s17] sm:$0x1]
    %19 = vrot.lane.b32.xlu0 %v18, 104
    %v20 = vpop.permute.xlu0 %19
    %vm21 = vcmask 917312
    %22 = vst.msk [vmem:[#allocation0] sm:$0x1] %vm21, %v20
    %s23 = scalar_lea.vmem %s0, 12
    %v24 = vld [vmem:[%s23] sm:$0x1]
    %25 = vrot.lane.b32.xlu0 %v24, 96
    %v26 = vpop.permute.xlu0 %25
    %vm27 = vcmask 851712
    %28 = vst.msk [vmem:[#allocation0] sm:$0x1] %vm27, %v26
    %s29 = scalar_lea.vmem %s0, 11
    %v30 = vld [vmem:[%s29] sm:$0x1]
    %31 = vrot.lane.b32.xlu0 %v30, 88
    %v32 = vpop.permute.xlu0 %31
    %vm33 = vcmask 786112
    %34 = vst.msk [vmem:[#allocation0] sm:$0x1] %vm33, %v32
    %s35 = scalar_lea.vmem %s0, 10
    %v36 = vld [vmem:[%s35] sm:$0x1]
    %37 = vrot.lane.b32.xlu0 %v36, 80
    %v38 = vpop.permute.xlu0 %37
    %vm39 = vcmask 720512
    %40 = vst.msk [vmem:[#allocation0] sm:$0x1] %vm39, %v38
    %s41 = scalar_lea.vmem %s0, 9
    %v42 = vld [vmem:[%s41] sm:$0x1]
    %43 = vrot.lane.b32.xlu0 %v42, 72
    %v44 = vpop.permute.xlu0 %43
    %vm45 = vcmask 654912
    %46 = vst.msk [vmem:[#allocation0] sm:$0x1] %vm45, %v44
    %s47 = scalar_lea.vmem %s0, 8
    %v48 = vld [vmem:[%s47] sm:$0x1]
    %49 = vrot.lane.b32.xlu0 %v48, 64
    %v50 = vpop.permute.xlu0 %49
    %vm51 = vcmask 589312
    %52 = vst.msk [vmem:[#allocation0] sm:$0x1] %vm51, %v50
    %s53 = scalar_lea.vmem %s0, 7
    %v54 = vld [vmem:[%s53] sm:$0x1]
    %55 = vrot.lane.b32.xlu0 %v54, 56
    %v56 = vpop.permute.xlu0 %55
    %vm57 = vcmask 523712
    %58 = vst.msk [vmem:[#allocation0] sm:$0x1] %vm57, %v56
    %s59 = scalar_lea.vmem %s0, 6
    %v60 = vld [vmem:[%s59] sm:$0x1]
    %61 = vrot.lane.b32.xlu0 %v60, 48
    %v62 = vpop.permute.xlu0 %61
    %vm63 = vcmask 458112
    %64 = vst.msk [vmem:[#allocation0] sm:$0x1] %vm63, %v62
    %s65 = scalar_lea.vmem %s0, 5
    %v66 = vld [vmem:[%s65] sm:$0x1]
    %67 = vrot.lane.b32.xlu0 %v66, 40
    %v68 = vpop.permute.xlu0 %67
    %vm69 = vcmask 392512
    %70 = vst.msk [vmem:[#allocation0] sm:$0x1] %vm69, %v68
    %s71 = scalar_lea.vmem %s0, 4
    %v72 = vld [vmem:[%s71] sm:$0x1]
    %73 = vrot.lane.b32.xlu0 %v72, 32
    %v74 = vpop.permute.xlu0 %73
    %vm75 = vcmask 326912
    %76 = vst.msk [vmem:[#allocation0] sm:$0x1] %vm75, %v74
    %s77 = scalar_lea.vmem %s0, 3
    %v78 = vld [vmem:[%s77] sm:$0x1]
    %79 = vrot.lane.b32.xlu0 %v78, 24
    %v80 = vpop.permute.xlu0 %79
    %vm81 = vcmask 261312
    %82 = vst.msk [vmem:[#allocation0] sm:$0x1] %vm81, %v80
    %s83 = scalar_lea.vmem %s0, 2
    %v84 = vld [vmem:[%s83] sm:$0x1]
    %85 = vrot.lane.b32.xlu0 %v84, 16
    %v86 = vpop.permute.xlu0 %85
    %vm87 = vcmask 195712
    %88 = vst.msk [vmem:[#allocation0] sm:$0x1] %vm87, %v86
    %s89 = scalar_lea.vmem %s0, 1
    %v90 = vld [vmem:[%s89] sm:$0x1]
    %91 = vrot.lane.b32.xlu0 %v90, 8
    %v92 = vpop.permute.xlu0 %91
    %vm93 = vcmask 130112
    %94 = vst.msk [vmem:[#allocation0] sm:$0x1] %vm93, %v92
    %s96 = sshllo.u32 0, 1
    %v98 = vld [vmem:[#allocation0] sm:%s96]
    %s99 = sshllo.u32 0, 1
    %100 = vst [vmem:[%s1] sm:%s99] %v98

// kernel: residual_block.3
$region0: #{residual_block.3}
  #allocation0 [shape = 'u32[]', space=smem, size = 0x4, offset = 0x4, fixed_abs, tag = 'smem constant byte address 0x4 - core index']
  #allocation1 [shape = 'u32[144,128]{1,0:T(1,128)}', space=vmem, size = 0x12000, scoped, tag = 'internal scratch']
  %s0 = inlined_call_operand.vmem [shape: f32[32,64], index: 0, kind: input, shape index: {}]
  %s1 = inlined_call_operand.vmem [shape: f32[64,128], index: 1, kind: input, shape index: {}]
  %s2 = inlined_call_operand.vmem [shape: f32[4,2,128], index: 2, kind: output, shape index: {}]
  %s3 = sld [smem:[#allocation0]]
  $region41: #{residual_block.3} parent=0
    _
  %s5 = ssub.s32 1, %s3
  %s6 = scalar_select 0, %s5, %s3
  loop: start=0, step=1, limit=6
  $region2: #{residual_block.3} parent=0 // loop_pre_header
    _
  $region3: #{residual_block.3} parent=0 // loop_header
    %s8 = sphi 0, %s12
    %p9 = scmp.ge.s32.totalorder %s8, 6
    %s18 = sphi 0, %s20
    %s21 = sphi 0, %s18
    %s22 = sphi 0, %s21
    %s38 = sphi 0, %s22
    %s42 = sphi 0, %s42
    %s44 = sphi 0, %s42
    %s45 = sphi 0, %s44
    %s59 = sphi 0, %s45
    %s65 = sphi 0, %s67
    %s68 = sphi 0, %s65
    %s69 = sphi 0, %s68
    %s85 = sphi 0, %s69
  $region4: #{residual_block.3} parent=0 // loop_header_branch
    %11 = sbr.rel (%p9) target = $region8
  $region5: #{residual_block.3} parent=0 // loop_body
    %s13 = ssub.s32 %s8, 1
    %s14 = ssub.s32 %s8, 2
    %s15 = sadd.s32 %s8, 1
    %s16 = ssub.s32 %s8, %s15
    %p17 = scmp.eq.s32.totalorder %s16, 0
    %s19 = sadd.s32 %s18, 1
    %s20 = scalar_select %p17, %s18, %s19
    %p23 = pneg %p17
    %p24 = scmp.eq.s32.totalorder %s8, 3
    %p25 = por %p23, %p24
    %p26 = scmp.ne.s32.totalorder %s18, %s21
    %p27 = scmp.eq.s32.totalorder %s8, 0
    %p28 = por %p26, %p27
    %p29 = scmp.ne.s32.totalorder %s18, %s21
    %p30 = scmp.eq.s32.totalorder %s13, 3
    %p31 = por %p29, %p30
    %p32 = scmp.ne.s32.totalorder %s21, %s22
    %p33 = scmp.eq.s32.totalorder %s13, 0
    %p34 = por %p32, %p33
    %p35 = scmp.ne.s32.totalorder %s21, %s22
    %p36 = scmp.eq.s32.totalorder %s14, 3
    %p37 = por %p35, %p36
    %p39 = scmp.ne.s32.totalorder %s22, %s38
    %p40 = scmp.eq.s32.totalorder %s14, 0
    %p41 = por %p39, %p40
    %s43 = sadd.s32 %s42, 1
    %p46 = scmp.eq.s32.totalorder %s8, 3
    %p47 = scmp.ne.s32.totalorder %s42, %s44
    %p48 = scmp.eq.s32.totalorder %s8, 0
    %p49 = por %p47, %p48
    %p50 = scmp.ne.s32.totalorder %s42, %s44
    %p51 = scmp.eq.s32.totalorder %s13, 3
    %p52 = por %p50, %p51
    %p53 = scmp.ne.s32.totalorder %s44, %s45
    %p54 = scmp.eq.s32.totalorder %s13, 0
    %p55 = por %p53, %p54
    %p56 = scmp.ne.s32.totalorder %s44, %s45
    %p57 = scmp.eq.s32.totalorder %s14, 3
    %p58 = por %p56, %p57
    %p60 = scmp.ne.s32.totalorder %s45, %s59
    %p61 = scmp.eq.s32.totalorder %s14, 0
    %p62 = por %p60, %p61
    %s63 = ssub.s32 %s8, %s15
    %p64 = scmp.eq.s32.totalorder %s63, 0
    %s66 = sadd.s32 %s65, 1
    %s67 = scalar_select %p64, %s65, %s66
    %p70 = pneg %p64
    %p71 = scmp.eq.s32.totalorder %s8, 3
    %p72 = por %p70, %p71
    %p73 = scmp.ne.s32.totalorder %s65, %s68
    %p74 = scmp.eq.s32.totalorder %s8, 0
    %p75 = por %p73, %p74
    %p76 = scmp.ne.s32.totalorder %s65, %s68
    %p77 = scmp.eq.s32.totalorder %s13, 3
    %p78 = por %p76, %p77
    %p79 = scmp.ne.s32.totalorder %s68, %s69
    %p80 = scmp.eq.s32.totalorder %s13, 0
    %p81 = por %p79, %p80
    %p82 = scmp.ne.s32.totalorder %s68, %s69
    %p83 = scmp.eq.s32.totalorder %s14, 3
    %p84 = por %p82, %p83
    %p86 = scmp.ne.s32.totalorder %s69, %s85
    %p87 = scmp.eq.s32.totalorder %s14, 0
    %p88 = por %p86, %p87
    %p89 = scmp.le.s32.totalorder 1, %s8
    %p90 = scmp.lt.s32.totalorder %s8, 5
    %p91 = pnand %p89, %p90
    %p92 = pneg %p91
    // Predicated region
    $region9: #{residual_block.3} parent=5 // pred_check
      _
    $region10: #{residual_block.3} parent=5 // pred_check_branch
      %94 = sbr.rel (%p91) target = $region12
    $region11: #{residual_block.3} parent=5 // pred_region
      %s95 = ssub.s32 %s8, 1
      // Predicated region
      $region13: #{residual_block.3} parent=11 // pred_check
        %p96 = pneg %p55
      $region14: #{residual_block.3} parent=11 // pred_check_branch
        %98 = sbr.rel (%p96) target = $region16
      $region15: #{residual_block.3} parent=11 // pred_region
        _
      $region16: #{residual_block.3} parent=11 // pred_fallthru
        _
    $region12: #{residual_block.3} parent=5 // pred_fallthru
      _
    %p99 = scmp.lt.s32.totalorder %s8, 4
    // Predicated region
    $region17: #{residual_block.3} parent=5 // pred_check
      %p100 = pneg %p99
    $region18: #{residual_block.3} parent=5 // pred_check_branch
      %102 = sbr.rel (%p100) target = $region20
    $region19: #{residual_block.3} parent=5 // pred_region
      // Predicated region
      $region21: #{residual_block.3} parent=19 // pred_check
        %p103 = pneg %p28
      $region22: #{residual_block.3} parent=19 // pred_check_branch
        %105 = sbr.rel (%p103) target = $region24
      $region23: #{residual_block.3} parent=19 // pred_region
        %p106 = scmp.lt.s32.totalorder %s8, 3
        %s107 = scalar_select %p106, %s8, 3
        %s108 = smul.addr %s107, 8
        %s109 = scalar_lea.vmem %s0, %s108
      $region24: #{residual_block.3} parent=19 // pred_fallthru
        _
    $region20: #{residual_block.3} parent=5 // pred_fallthru
      _
    %p110 = scmp.le.s32.totalorder 1, %s8
    %p111 = scmp.lt.s32.totalorder %s8, 5
    %p112 = pnand %p110, %p111
    %p113 = pneg %p112
    // Predicated region
    $region25: #{residual_block.3} parent=5 // pred_check
      _
    $region26: #{residual_block.3} parent=5 // pred_check_branch
      %115 = sbr.rel (%p112) target = $region28
    $region27: #{residual_block.3} parent=5 // pred_region
      %s116 = ssub.s32 %s8, 1
      %p117 = scmp.lt.s32.totalorder %s13, 3
      %s118 = scalar_select %p117, %s13, 3
      %s119 = smul.addr %s118, 8
      %s120 = scalar_lea.vmem %s0, %s119
      %p121 = pneg %p34
      %p122 = pneg %p31
      %p123 = pneg %p55
      %p124 = pneg %p52
      %p125 = pneg %p81
      %p126 = pneg %p78
      %p127 = scmp.lt.s32.totalorder %s13, 3
      %s128 = scalar_select %p127, %s13, 3
      %s129 = smul.addr %s128, 2
      %s130 = scalar_lea.vmem %s2, %s129
      %p131 = scmp.lt.s32.totalorder %s13, 3
      %s132 = scalar_select %p131, %s13, 3
      %s133 = smul.addr %s132, 8
      %s134 = scalar_lea.vmem %s0, %s133
      %p135 = scmp.lt.s32.totalorder %s13, 3
      %s136 = scalar_select %p135, %s13, 3
      %s137 = smul.addr %s136, 2
      %s138 = scalar_lea.vmem %s2, %s137
      %v139 = vld [vmem:[%s134] sm:$0xff]
      %v140 = vld [vmem:[%s1] sm:$0xff]
      %v141 = vld [vmem:[%s1 + $0x8] sm:$0xff]
      %v142 = vld [vmem:[%s1 + $0x10] sm:$0xff]
      %v143 = vld [vmem:[%s1 + $0x18] sm:$0xff]
      %v144 = vld [vmem:[%s1 + $0x20] sm:$0xff]
      %v145 = vld [vmem:[%s1 + $0x28] sm:$0xff]
      %v146 = vld [vmem:[%s1 + $0x30] sm:$0xff]
      %v147 = vld [vmem:[%s1 + $0x38] sm:$0xff]
      %vm148 = vcmask 523264
      %v150 = vsel %vm148, %v139, 0
      %152 = vmatprep.subr.mxu0 0.0
      %153 = vmatpush1.msra.mxu0 %v140
      %154 = vmatprep.subr.mxu0 0.0
      %155 = vmatpush1.msra.mxu0 %v141
      %156 = vmatprep.subr.mxu0 0.0
      %157 = vmatpush1.msra.mxu0 %v142
      %158 = vmatprep.subr.mxu0 0.0
      %159 = vmatpush1.msra.mxu0 %v143
      %160 = vmatprep.subr.mxu0 0.0
      %161 = vmatpush1.msra.mxu0 %v144
      %162 = vmatprep.subr.mxu0 0.0
      %163 = vmatpush1.msra.mxu0 %v145
      %164 = vmatprep.subr.mxu0 0.0
      %165 = vmatpush1.msra.mxu0 %v146
      %166 = vmatprep.subr.mxu0 0.0
      %167 = vmatpush1.msra.mxu0 %v147
      %168 = vmatprep.subr.mxu0 0.0
      %169 = vmatpush1.msra.mxu0 0.0
      %170 = vmatprep.subr.mxu0 0.0
      %171 = vmatpush1.msra.mxu0 0.0
      %172 = vmatprep.subr.mxu0 0.0
      %173 = vmatpush1.msra.mxu0 0.0
      %174 = vmatprep.subr.mxu0 0.0
      %175 = vmatpush1.msra.mxu0 0.0
      %176 = vmatprep.subr.mxu0 0.0
      %177 = vmatpush1.msra.mxu0 0.0
      %178 = vmatprep.subr.mxu0 0.0
      %179 = vmatpush1.msra.mxu0 0.0
      %180 = vmatprep.subr.mxu0 0.0
      %181 = vmatpush1.msra.mxu0 0.0
      %182 = vmatprep.subr.mxu0 0.0
      %183 = vmatpush1.msra.mxu0 0.0
      %184 = vmatprep.subr.mxu0 0.0
      %185 = vmatpush1.msra.mxu0 0.0
      %186 = vmatprep.subr.mxu0 0.0
      %187 = vmatpush1.msra.mxu0 0.0
      %188 = vmatprep.subr.mxu0 0.0
      %189 = vmatpush1.msra.mxu0 0.0
      %190 = vmatprep.subr.mxu0 0.0
      %191 = vmatpush1.msra.mxu0 0.0
      %192 = vmatprep.subr.mxu0 0.0
      %193 = vmatpush1.msra.mxu0 0.0
      %194 = vmatprep.subr.mxu0 0.0
      %195 = vmatpush1.msra.mxu0 0.0
      %196 = vmatprep.subr.mxu0 0.0
      %197 = vmatpush1.msra.mxu0 0.0
      %198 = vmatprep.subr.mxu0 0.0
      %199 = vmatpush1.msra.mxu0 0.0
      %200 = vmatprep.subr.mxu0 0.0
      %201 = vmatpush1.msra.mxu0 0.0
      %202 = vmatprep.subr.mxu0 0.0
      %203 = vmatpush1.msra.mxu0 0.0
      %204 = vmatprep.subr.mxu0 0.0
      %205 = vmatpush1.msra.mxu0 0.0
      %206 = vmatprep.subr.mxu0 0.0
      %207 = vmatpush1.msra.mxu0 0.0
      %208 = vmatprep.subr.mxu0 0.0
      %209 = vmatpush1.msra.mxu0 0.0
      %210 = vmatprep.subr.mxu0 0.0
      %211 = vmatpush1.msra.mxu0 0.0
      %212 = vmatprep.subr.mxu0 0.0
      %213 = vmatpush1.msra.mxu0 0.0
      %214 = vmatprep.subr.mxu0 0.0
      %215 = vmatpush1.msra.mxu0 0.0
      %216 = vmatprep.mubr.f32.mxu0 0.0
      %217 = vmatmul.mubr.f32.gmra.mrb[0].mxu0 %v150
      %v218 = vpop.f32.mrb[0].mxu0
      %v219 = vadd.f32 0.0, %v218
      %v220 = vpop.f32.mrb[0].mxu0
      %221 = vdwg.mxu0
      %v222 = vrot.slane %v219, 4
      %v223 = vadd.f32 %v219, %v222
      %v224 = vrot.slane %v223, 2
      %v225 = vadd.f32 %v223, %v224
      %v226 = vrot.slane %v225, 1
      %v227 = vadd.f32 %v225, %v226
      %v228 = vmul.f32 %v219, %v219
      %v229 = vrot.slane %v228, 4
      %v230 = vadd.f32 %v228, %v229
      %v231 = vrot.slane %v230, 2
      %v232 = vadd.f32 %v230, %v231
      %v233 = vrot.slane %v232, 1
      %v234 = vadd.f32 %v232, %v233
      %vm235 = vcmask 1040384
      %v236 = vsel %vm235, %v227, %v234
      %237 = vst [vmem:[%s138] sm:$0x3] %v236
      %p238 = scmp.lt.s32.totalorder %s13, 3
      %s239 = scalar_select %p238, %s13, 3
      %s240 = smul.addr %s239, 2
      %s241 = scalar_lea.vmem %s2, %s240
      // Predicated region
      $region29: #{residual_block.3} parent=27 // pred_check
        %p242 = pneg %p78
      $region30: #{residual_block.3} parent=27 // pred_check_branch
        %244 = sbr.rel (%p242) target = $region32
      $region31: #{residual_block.3} parent=27 // pred_region
        _
      $region32: #{residual_block.3} parent=27 // pred_fallthru
        _
    $region28: #{residual_block.3} parent=5 // pred_fallthru
      _
    %p245 = scmp.le.s32.totalorder 2, %s8
    // Predicated region
    $region33: #{residual_block.3} parent=5 // pred_check
      %p246 = pneg %p245
    $region34: #{residual_block.3} parent=5 // pred_check_branch
      %248 = sbr.rel (%p246) target = $region36
    $region35: #{residual_block.3} parent=5 // pred_region
      %s249 = ssub.s32 %s8, 2
      // Predicated region
      $region37: #{residual_block.3} parent=35 // pred_check
        %p250 = pneg %p84
      $region38: #{residual_block.3} parent=35 // pred_check_branch
        %252 = sbr.rel (%p250) target = $region40
      $region39: #{residual_block.3} parent=35 // pred_region
        %p253 = scmp.lt.s32.totalorder %s14, 3
        %s254 = scalar_select %p253, %s14, 3
        %s255 = smul.addr %s254, 2
        %s256 = scalar_lea.vmem %s2, %s255
      $region40: #{residual_block.3} parent=35 // pred_fallthru
        _
    $region36: #{residual_block.3} parent=5 // pred_fallthru
      _
  $region6: #{residual_block.3} parent=0 // loop_footer
    %s12 = sadd.s32 1, %s8
  $region7: #{residual_block.3} parent=0 // loop_footer_branch
    %7 = sbr.rel target = $region3
  $region8: #{residual_block.3} parent=0 // loop_exit
    _

// kernel: residual_block.5
$region0: #{residual_block.5}
  #allocation0 [shape = 'u32[]', space=smem, size = 0x4, offset = 0x4, fixed_abs, tag = 'smem constant byte address 0x4 - core index']
  #allocation1 [shape = 'u32[144,128]{1,0:T(1,128)}', space=vmem, size = 0x12000, scoped, tag = 'internal scratch']
  %s0 = inlined_call_operand.vmem [shape: f32[32,128], index: 0, kind: input, shape index: {}]
  %s1 = inlined_call_operand.vmem [shape: f32[32,64], index: 1, kind: input, shape index: {}]
  %s2 = inlined_call_operand.vmem [shape: f32[64,128], index: 2, kind: input, shape index: {}]
  %s3 = inlined_call_operand.vmem [shape: f32[1,128], index: 3, kind: input, shape index: {}]
  %s4 = inlined_call_operand.vmem [shape: f32[1,128], index: 4, kind: input, shape index: {}]
  %s5 = inlined_call_operand.vmem [shape: f32[32,128], index: 5, kind: output, shape index: {}]
  %s6 = sld [smem:[#allocation0]]
  $region53: #{residual_block.5} parent=0
    _
  %s8 = ssub.s32 1, %s6
  %s9 = scalar_select 0, %s8, %s6
  loop: start=0, step=1, limit=6
  $region2: #{residual_block.5} parent=0 // loop_pre_header
    _
  $region3: #{residual_block.5} parent=0 // loop_header
    %s11 = sphi 0, %s15
    %p12 = scmp.ge.s32.totalorder %s11, 6
    %s21 = sphi 0, %s23
    %s24 = sphi 0, %s21
    %s25 = sphi 0, %s24
    %s41 = sphi 0, %s25
    %s47 = sphi 0, %s49
    %s50 = sphi 0, %s47
    %s51 = sphi 0, %s50
    %s67 = sphi 0, %s51
    %s71 = sphi 0, %s71
    %s73 = sphi 0, %s71
    %s74 = sphi 0, %s73
    %s88 = sphi 0, %s74
    %s92 = sphi 0, %s92
    %s94 = sphi 0, %s92
    %s95 = sphi 0, %s94
    %s109 = sphi 0, %s95
    %s113 = sphi 0, %s113
    %s115 = sphi 0, %s113
    %s116 = sphi 0, %s115
    %s130 = sphi 0, %s116
    %s136 = sphi 0, %s138
    %s139 = sphi 0, %s136
    %s140 = sphi 0, %s139
    %s156 = sphi 0, %s140
  $region4: #{residual_block.5} parent=0 // loop_header_branch
    %14 = sbr.rel (%p12) target = $region8
  $region5: #{residual_block.5} parent=0 // loop_body
    %s16 = ssub.s32 %s11, 1
    %s17 = ssub.s32 %s11, 2
    %s18 = sadd.s32 %s11, 1
    %s19 = ssub.s32 %s11, %s18
    %p20 = scmp.eq.s32.totalorder %s19, 0
    %s22 = sadd.s32 %s21, 1
    %s23 = scalar_select %p20, %s21, %s22
    %p26 = pneg %p20
    %p27 = scmp.eq.s32.totalorder %s11, 3
    %p28 = por %p26, %p27
    %p29 = scmp.ne.s32.totalorder %s21, %s24
    %p30 = scmp.eq.s32.totalorder %s11, 0
    %p31 = por %p29, %p30
    %p32 = scmp.ne.s32.totalorder %s21, %s24
    %p33 = scmp.eq.s32.totalorder %s16, 3
    %p34 = por %p32, %p33
    %p35 = scmp.ne.s32.totalorder %s24, %s25
    %p36 = scmp.eq.s32.totalorder %s16, 0
    %p37 = por %p35, %p36
    %p38 = scmp.ne.s32.totalorder %s24, %s25
    %p39 = scmp.eq.s32.totalorder %s17, 3
    %p40 = por %p38, %p39
    %p42 = scmp.ne.s32.totalorder %s25, %s41
    %p43 = scmp.eq.s32.totalorder %s17, 0
    %p44 = por %p42, %p43
    %s45 = ssub.s32 %s11, %s18
    %p46 = scmp.eq.s32.totalorder %s45, 0
    %s48 = sadd.s32 %s47, 1
    %s49 = scalar_select %p46, %s47, %s48
    %p52 = pneg %p46
    %p53 = scmp.eq.s32.totalorder %s11, 3
    %p54 = por %p52, %p53
    %p55 = scmp.ne.s32.totalorder %s47, %s50
    %p56 = scmp.eq.s32.totalorder %s11, 0
    %p57 = por %p55, %p56
    %p58 = scmp.ne.s32.totalorder %s47, %s50
    %p59 = scmp.eq.s32.totalorder %s16, 3
    %p60 = por %p58, %p59
    %p61 = scmp.ne.s32.totalorder %s50, %s51
    %p62 = scmp.eq.s32.totalorder %s16, 0
    %p63 = por %p61, %p62
    %p64 = scmp.ne.s32.totalorder %s50, %s51
    %p65 = scmp.eq.s32.totalorder %s17, 3
    %p66 = por %p64, %p65
    %p68 = scmp.ne.s32.totalorder %s51, %s67
    %p69 = scmp.eq.s32.totalorder %s17, 0
    %p70 = por %p68, %p69
    %s72 = sadd.s32 %s71, 1
    %p75 = scmp.eq.s32.totalorder %s11, 3
    %p76 = scmp.ne.s32.totalorder %s71, %s73
    %p77 = scmp.eq.s32.totalorder %s11, 0
    %p78 = por %p76, %p77
    %p79 = scmp.ne.s32.totalorder %s71, %s73
    %p80 = scmp.eq.s32.totalorder %s16, 3
    %p81 = por %p79, %p80
    %p82 = scmp.ne.s32.totalorder %s73, %s74
    %p83 = scmp.eq.s32.totalorder %s16, 0
    %p84 = por %p82, %p83
    %p85 = scmp.ne.s32.totalorder %s73, %s74
    %p86 = scmp.eq.s32.totalorder %s17, 3
    %p87 = por %p85, %p86
    %p89 = scmp.ne.s32.totalorder %s74, %s88
    %p90 = scmp.eq.s32.totalorder %s17, 0
    %p91 = por %p89, %p90
    %s93 = sadd.s32 %s92, 1
    %p96 = scmp.eq.s32.totalorder %s11, 3
    %p97 = scmp.ne.s32.totalorder %s92, %s94
    %p98 = scmp.eq.s32.totalorder %s11, 0
    %p99 = por %p97, %p98
    %p100 = scmp.ne.s32.totalorder %s92, %s94
    %p101 = scmp.eq.s32.totalorder %s16, 3
    %p102 = por %p100, %p101
    %p103 = scmp.ne.s32.totalorder %s94, %s95
    %p104 = scmp.eq.s32.totalorder %s16, 0
    %p105 = por %p103, %p104
    %p106 = scmp.ne.s32.totalorder %s94, %s95
    %p107 = scmp.eq.s32.totalorder %s17, 3
    %p108 = por %p106, %p107
    %p110 = scmp.ne.s32.totalorder %s95, %s109
    %p111 = scmp.eq.s32.totalorder %s17, 0
    %p112 = por %p110, %p111
    %s114 = sadd.s32 %s113, 1
    %p117 = scmp.eq.s32.totalorder %s11, 3
    %p118 = scmp.ne.s32.totalorder %s113, %s115
    %p119 = scmp.eq.s32.totalorder %s11, 0
    %p120 = por %p118, %p119
    %p121 = scmp.ne.s32.totalorder %s113, %s115
    %p122 = scmp.eq.s32.totalorder %s16, 3
    %p123 = por %p121, %p122
    %p124 = scmp.ne.s32.totalorder %s115, %s116
    %p125 = scmp.eq.s32.totalorder %s16, 0
    %p126 = por %p124, %p125
    %p127 = scmp.ne.s32.totalorder %s115, %s116
    %p128 = scmp.eq.s32.totalorder %s17, 3
    %p129 = por %p127, %p128
    %p131 = scmp.ne.s32.totalorder %s116, %s130
    %p132 = scmp.eq.s32.totalorder %s17, 0
    %p133 = por %p131, %p132
    %s134 = ssub.s32 %s11, %s18
    %p135 = scmp.eq.s32.totalorder %s134, 0
    %s137 = sadd.s32 %s136, 1
    %s138 = scalar_select %p135, %s136, %s137
    %p141 = pneg %p135
    %p142 = scmp.eq.s32.totalorder %s11, 3
    %p143 = por %p141, %p142
    %p144 = scmp.ne.s32.totalorder %s136, %s139
    %p145 = scmp.eq.s32.totalorder %s11, 0
    %p146 = por %p144, %p145
    %p147 = scmp.ne.s32.totalorder %s136, %s139
    %p148 = scmp.eq.s32.totalorder %s16, 3
    %p149 = por %p147, %p148
    %p150 = scmp.ne.s32.totalorder %s139, %s140
    %p151 = scmp.eq.s32.totalorder %s16, 0
    %p152 = por %p150, %p151
    %p153 = scmp.ne.s32.totalorder %s139, %s140
    %p154 = scmp.eq.s32.totalorder %s17, 3
    %p155 = por %p153, %p154
    %p157 = scmp.ne.s32.totalorder %s140, %s156
    %p158 = scmp.eq.s32.totalorder %s17, 0
    %p159 = por %p157, %p158
    %p160 = scmp.le.s32.totalorder 1, %s11
    %p161 = scmp.lt.s32.totalorder %s11, 5
    %p162 = pnand %p160, %p161
    %p163 = pneg %p162
    // Predicated region
    $region9: #{residual_block.5} parent=5 // pred_check
      _
    $region10: #{residual_block.5} parent=5 // pred_check_branch
      %165 = sbr.rel (%p162) target = $region12
    $region11: #{residual_block.5} parent=5 // pred_region
      %s166 = ssub.s32 %s11, 1
      // Predicated region
      $region13: #{residual_block.5} parent=11 // pred_check
        %p167 = pneg %p84
      $region14: #{residual_block.5} parent=11 // pred_check_branch
        %169 = sbr.rel (%p167) target = $region16
      $region15: #{residual_block.5} parent=11 // pred_region
        _
      $region16: #{residual_block.5} parent=11 // pred_fallthru
        _
      // Predicated region
      $region17: #{residual_block.5} parent=11 // pred_check
        %p170 = pneg %p105
      $region18: #{residual_block.5} parent=11 // pred_check_branch
        %172 = sbr.rel (%p170) target = $region20
      $region19: #{residual_block.5} parent=11 // pred_region
        _
      $region20: #{residual_block.5} parent=11 // pred_fallthru
        _
      // Predicated region
      $region21: #{residual_block.5} parent=11 // pred_check
        %p173 = pneg %p126
      $region22: #{residual_block.5} parent=11 // pred_check_branch
        %175 = sbr.rel (%p173) target = $region24
      $region23: #{residual_block.5} parent=11 // pred_region
        _
      $region24: #{residual_block.5} parent=11 // pred_fallthru
        _
    $region12: #{residual_block.5} parent=5 // pred_fallthru
      _
    %p176 = scmp.lt.s32.totalorder %s11, 4
    // Predicated region
    $region25: #{residual_block.5} parent=5 // pred_check
      %p177 = pneg %p176
    $region26: #{residual_block.5} parent=5 // pred_check_branch
      %179 = sbr.rel (%p177) target = $region28
    $region27: #{residual_block.5} parent=5 // pred_region
      // Predicated region
      $region29: #{residual_block.5} parent=27 // pred_check
        %p180 = pneg %p31
      $region30: #{residual_block.5} parent=27 // pred_check_branch
        %182 = sbr.rel (%p180) target = $region32
      $region31: #{residual_block.5} parent=27 // pred_region
        %p183 = scmp.lt.s32.totalorder %s11, 3
        %s184 = scalar_select %p183, %s11, 3
        %s185 = smul.addr %s184, 8
        %s186 = scalar_lea.vmem %s0, %s185
      $region32: #{residual_block.5} parent=27 // pred_fallthru
        _
      // Predicated region
      $region33: #{residual_block.5} parent=27 // pred_check
        %p187 = pneg %p57
      $region34: #{residual_block.5} parent=27 // pred_check_branch
        %189 = sbr.rel (%p187) target = $region36
      $region35: #{residual_block.5} parent=27 // pred_region
        %p190 = scmp.lt.s32.totalorder %s11, 3
        %s191 = scalar_select %p190, %s11, 3
        %s192 = smul.addr %s191, 8
        %s193 = scalar_lea.vmem %s1, %s192
      $region36: #{residual_block.5} parent=27 // pred_fallthru
        _
    $region28: #{residual_block.5} parent=5 // pred_fallthru
      _
    %p194 = scmp.le.s32.totalorder 1, %s11
    %p195 = scmp.lt.s32.totalorder %s11, 5
    %p196 = pnand %p194, %p195
    %p197 = pneg %p196
    // Predicated region
    $region37: #{residual_block.5} parent=5 // pred_check
      _
    $region38: #{residual_block.5} parent=5 // pred_check_branch
      %199 = sbr.rel (%p196) target = $region40
    $region39: #{residual_block.5} parent=5 // pred_region
      %s200 = ssub.s32 %s11, 1
      %p201 = scmp.lt.s32.totalorder %s16, 3
      %s202 = scalar_select %p201, %s16, 3
      %s203 = smul.addr %s202, 8
      %s204 = scalar_lea.vmem %s0, %s203
      %p205 = pneg %p37
      %p206 = pneg %p34
      %p207 = scmp.lt.s32.totalorder %s16, 3
      %s208 = scalar_select %p207, %s16, 3
      %s209 = smul.addr %s208, 8
      %s210 = scalar_lea.vmem %s1, %s209
      %p211 = pneg %p63
      %p212 = pneg %p60
      %p213 = pneg %p84
      %p214 = pneg %p81
      %p215 = pneg %p105
      %p216 = pneg %p102
      %p217 = pneg %p126
      %p218 = pneg %p123
      %p219 = pneg %p152
      %p220 = pneg %p149
      %p221 = scmp.lt.s32.totalorder %s16, 3
      %s222 = scalar_select %p221, %s16, 3
      %s223 = smul.addr %s222, 8
      %s224 = scalar_lea.vmem %s5, %s223
      %p225 = scmp.lt.s32.totalorder %s16, 3
      %s226 = scalar_select %p225, %s16, 3
      %s227 = smul.addr %s226, 8
      %s228 = scalar_lea.vmem %s0, %s227
      %p229 = scmp.lt.s32.totalorder %s16, 3
      %s230 = scalar_select %p229, %s16, 3
      %s231 = smul.addr %s230, 8
      %s232 = scalar_lea.vmem %s1, %s231
      %p233 = scmp.lt.s32.totalorder %s16, 3
      %s234 = scalar_select %p233, %s16, 3
      %s235 = smul.addr %s234, 8
      %s236 = scalar_lea.vmem %s5, %s235
      %v237 = vld [vmem:[%s232] sm:$0xff]
      %v238 = vld [vmem:[%s2] sm:$0xff]
      %v239 = vld [vmem:[%s2 + $0x8] sm:$0xff]
      %v240 = vld [vmem:[%s2 + $0x10] sm:$0xff]
      %v241 = vld [vmem:[%s2 + $0x18] sm:$0xff]
      %v242 = vld [vmem:[%s2 + $0x20] sm:$0xff]
      %v243 = vld [vmem:[%s2 + $0x28] sm:$0xff]
      %v244 = vld [vmem:[%s2 + $0x30] sm:$0xff]
      %v245 = vld [vmem:[%s2 + $0x38] sm:$0xff]
      %vm246 = vcmask 523264
      %v248 = vsel %vm246, %v237, 0
      %250 = vmatprep.subr.mxu0 0.0
      %251 = vmatpush1.msra.mxu0 %v238
      %252 = vmatprep.subr.mxu0 0.0
      %253 = vmatpush1.msra.mxu0 %v239
      %254 = vmatprep.subr.mxu0 0.0
      %255 = vmatpush1.msra.mxu0 %v240
      %256 = vmatprep.subr.mxu0 0.0
      %257 = vmatpush1.msra.mxu0 %v241
      %258 = vmatprep.subr.mxu0 0.0
      %259 = vmatpush1.msra.mxu0 %v242
      %260 = vmatprep.subr.mxu0 0.0
      %261 = vmatpush1.msra.mxu0 %v243
      %262 = vmatprep.subr.mxu0 0.0
      %263 = vmatpush1.msra.mxu0 %v244
      %264 = vmatprep.subr.mxu0 0.0
      %265 = vmatpush1.msra.mxu0 %v245
      %266 = vmatprep.subr.mxu0 0.0
      %267 = vmatpush1.msra.mxu0 0.0
      %268 = vmatprep.subr.mxu0 0.0
      %269 = vmatpush1.msra.mxu0 0.0
      %270 = vmatprep.subr.mxu0 0.0
      %271 = vmatpush1.msra.mxu0 0.0
      %272 = vmatprep.subr.mxu0 0.0
      %273 = vmatpush1.msra.mxu0 0.0
      %274 = vmatprep.subr.mxu0 0.0
      %275 = vmatpush1.msra.mxu0 0.0
      %276 = vmatprep.subr.mxu0 0.0
      %277 = vmatpush1.msra.mxu0 0.0
      %278 = vmatprep.subr.mxu0 0.0
      %279 = vmatpush1.msra.mxu0 0.0
      %280 = vmatprep.subr.mxu0 0.0
      %281 = vmatpush1.msra.mxu0 0.0
      %282 = vmatprep.subr.mxu0 0.0
      %283 = vmatpush1.msra.mxu0 0.0
      %284 = vmatprep.subr.mxu0 0.0
      %285 = vmatpush1.msra.mxu0 0.0
      %286 = vmatprep.subr.mxu0 0.0
      %287 = vmatpush1.msra.mxu0 0.0
      %288 = vmatprep.subr.mxu0 0.0
      %289 = vmatpush1.msra.mxu0 0.0
      %290 = vmatprep.subr.mxu0 0.0
      %291 = vmatpush1.msra.mxu0 0.0
      %292 = vmatprep.subr.mxu0 0.0
      %293 = vmatpush1.msra.mxu0 0.0
      %294 = vmatprep.subr.mxu0 0.0
      %295 = vmatpush1.msra.mxu0 0.0
      %296 = vmatprep.subr.mxu0 0.0
      %297 = vmatpush1.msra.mxu0 0.0
      %298 = vmatprep.subr.mxu0 0.0
      %299 = vmatpush1.msra.mxu0 0.0
      %300 = vmatprep.subr.mxu0 0.0
      %301 = vmatpush1.msra.mxu0 0.0
      %302 = vmatprep.subr.mxu0 0.0
      %303 = vmatpush1.msra.mxu0 0.0
      %304 = vmatprep.subr.mxu0 0.0
      %305 = vmatpush1.msra.mxu0 0.0
      %306 = vmatprep.subr.mxu0 0.0
      %307 = vmatpush1.msra.mxu0 0.0
      %308 = vmatprep.subr.mxu0 0.0
      %309 = vmatpush1.msra.mxu0 0.0
      %310 = vmatprep.subr.mxu0 0.0
      %311 = vmatpush1.msra.mxu0 0.0
      %312 = vmatprep.subr.mxu0 0.0
      %313 = vmatpush1.msra.mxu0 0.0
      %314 = vmatprep.mubr.f32.mxu0 0.0
      %315 = vmatmul.mubr.f32.gmra.mrb[0].mxu0 %v248
      %v316 = vpop.f32.mrb[0].mxu0
      %v317 = vadd.f32 0.0, %v316
      %v318 = vpop.f32.mrb[0].mxu0
      %319 = vdwg.mxu0
      %v320 = vld [vmem:[%s228] sm:$0xff]
      %v321 = vld [vmem:[%s3] sm:$0x1]
      %v323 = vlaneseq
      %v324 = vshrl.u32 %v323, 7
      %v325 = vsub.s32 0, %v324
      %v326 = vrot.slane %v321, %v325
      %v328 = vmul.f32 %v320, %v326
      %v329 = vld [vmem:[%s4] sm:$0x1]
      %v331 = vlaneseq
      %v332 = vshrl.u32 %v331, 7
      %v333 = vsub.s32 0, %v332
      %v334 = vrot.slane %v329, %v333
      %v336 = vadd.f32 %v328, %v334
      %v337 = vadd.f32 %v336, %v317
      %vm338 = vcmp.gt.f32.partialorder %v337, 0.0
      %v339 = vmin.f32 %v337, 0.0
      %v340 = vmul.f32 %v339, 1.442695
      %v341 = vpow.pop %v340
      %v342 = vsub.f32 %v341, 1.0
      %v343 = vsel %vm338, %v337, %v342
      %344 = vst [vmem:[%s236] sm:$0xff] %v343
      %p345 = scmp.lt.s32.totalorder %s16, 3
      %s346 = scalar_select %p345, %s16, 3
      %s347 = smul.addr %s346, 8
      %s348 = scalar_lea.vmem %s5, %s347
      // Predicated region
      $region41: #{residual_block.5} parent=39 // pred_check
        %p349 = pneg %p149
      $region42: #{residual_block.5} parent=39 // pred_check_branch
        %351 = sbr.rel (%p349) target = $region44
      $region43: #{residual_block.5} parent=39 // pred_region
        _
      $region44: #{residual_block.5} parent=39 // pred_fallthru
        _
    $region40: #{residual_block.5} parent=5 // pred_fallthru
      _
    %p352 = scmp.le.s32.totalorder 2, %s11
    // Predicated region
    $region45: #{residual_block.5} parent=5 // pred_check
      %p353 = pneg %p352
    $region46: #{residual_block.5} parent=5 // pred_check_branch
      %355 = sbr.rel (%p353) target = $region48
    $region47: #{residual_block.5} parent=5 // pred_region
      %s356 = ssub.s32 %s11, 2
      // Predicated region
      $region49: #{residual_block.5} parent=47 // pred_check
        %p357 = pneg %p155
      $region50: #{residual_block.5} parent=47 // pred_check_branch
        %359 = sbr.rel (%p357) target = $region52
      $region51: #{residual_block.5} parent=47 // pred_region
        %p360 = scmp.lt.s32.totalorder %s17, 3
        %s361 = scalar_select %p360, %s17, 3
        %s362 = smul.addr %s361, 8
        %s363 = scalar_lea.vmem %s5, %s362
      $region52: #{residual_block.5} parent=47 // pred_fallthru
        _
    $region48: #{residual_block.5} parent=5 // pred_fallthru
      _
  $region6: #{residual_block.5} parent=0 // loop_footer
    %s15 = sadd.s32 1, %s11
  $region7: #{residual_block.5} parent=0 // loop_footer_branch
    %10 = sbr.rel target = $region3
  $region8: #{residual_block.5} parent=0 // loop_exit
    _

// kernel: residual_block.4
$region0: #{residual_block.4}
  #allocation0 [shape = 'u32[]', space=smem, size = 0x4, offset = 0x4, fixed_abs, tag = 'smem constant byte address 0x4 - core index']
  #allocation1 [shape = 'u32[144,128]{1,0:T(1,128)}', space=vmem, size = 0x12000, scoped, tag = 'internal scratch']
  %s0 = inlined_call_operand.vmem [shape: f32[32,64], index: 0, kind: input, shape index: {}]
  %s1 = inlined_call_operand.vmem [shape: f32[64,128], index: 1, kind: input, shape index: {}]
  %s2 = inlined_call_operand.vmem [shape: f32[1,128], index: 2, kind: input, shape index: {}]
  %s3 = inlined_call_operand.vmem [shape: f32[1,128], index: 3, kind: input, shape index: {}]
  %s4 = inlined_call_operand.vmem [shape: f32[128,128], index: 4, kind: input, shape index: {}]
  %s5 = inlined_call_operand.vmem [shape: f32[32,128], index: 5, kind: output, shape index: {0}]
  %s6 = inlined_call_operand.vmem [shape: f32[4,2,128], index: 6, kind: output, shape index: {1}]
  %7 = xla_tuple %s5, %s6
  %s8 = sld [smem:[#allocation0]]
  $region61: #{residual_block.4} parent=0
    _
  %s10 = ssub.s32 1, %s8
  %s11 = scalar_select 0, %s10, %s8
  loop: start=0, step=1, limit=6
  $region2: #{residual_block.4} parent=0 // loop_pre_header
    _
  $region3: #{residual_block.4} parent=0 // loop_header
    %s13 = sphi 0, %s17
    %p14 = scmp.ge.s32.totalorder %s13, 6
    %s23 = sphi 0, %s25
    %s26 = sphi 0, %s23
    %s27 = sphi 0, %s26
    %s43 = sphi 0, %s27
    %s47 = sphi 0, %s47
    %s49 = sphi 0, %s47
    %s50 = sphi 0, %s49
    %s64 = sphi 0, %s50
    %s68 = sphi 0, %s68
    %s70 = sphi 0, %s68
    %s71 = sphi 0, %s70
    %s85 = sphi 0, %s71
    %s89 = sphi 0, %s89
    %s91 = sphi 0, %s89
    %s92 = sphi 0, %s91
    %s106 = sphi 0, %s92
    %s110 = sphi 0, %s110
    %s112 = sphi 0, %s110
    %s113 = sphi 0, %s112
    %s127 = sphi 0, %s113
    %s133 = sphi 0, %s135
    %s136 = sphi 0, %s133
    %s137 = sphi 0, %s136
    %s153 = sphi 0, %s137
    %s159 = sphi 0, %s161
    %s162 = sphi 0, %s159
    %s163 = sphi 0, %s162
    %s179 = sphi 0, %s163
  $region4: #{residual_block.4} parent=0 // loop_header_branch
    %16 = sbr.rel (%p14) target = $region8
  $region5: #{residual_block.4} parent=0 // loop_body
    %s18 = ssub.s32 %s13, 1
    %s19 = ssub.s32 %s13, 2
    %s20 = sadd.s32 %s13, 1
    %s21 = ssub.s32 %s13, %s20
    %p22 = scmp.eq.s32.totalorder %s21, 0
    %s24 = sadd.s32 %s23, 1
    %s25 = scalar_select %p22, %s23, %s24
    %p28 = pneg %p22
    %p29 = scmp.eq.s32.totalorder %s13, 3
    %p30 = por %p28, %p29
    %p31 = scmp.ne.s32.totalorder %s23, %s26
    %p32 = scmp.eq.s32.totalorder %s13, 0
    %p33 = por %p31, %p32
    %p34 = scmp.ne.s32.totalorder %s23, %s26
    %p35 = scmp.eq.s32.totalorder %s18, 3
    %p36 = por %p34, %p35
    %p37 = scmp.ne.s32.totalorder %s26, %s27
    %p38 = scmp.eq.s32.totalorder %s18, 0
    %p39 = por %p37, %p38
    %p40 = scmp.ne.s32.totalorder %s26, %s27
    %p41 = scmp.eq.s32.totalorder %s19, 3
    %p42 = por %p40, %p41
    %p44 = scmp.ne.s32.totalorder %s27, %s43
    %p45 = scmp.eq.s32.totalorder %s19, 0
    %p46 = por %p44, %p45
    %s48 = sadd.s32 %s47, 1
    %p51 = scmp.eq.s32.totalorder %s13, 3
    %p52 = scmp.ne.s32.totalorder %s47, %s49
    %p53 = scmp.eq.s32.totalorder %s13, 0
    %p54 = por %p52, %p53
    %p55 = scmp.ne.s32.totalorder %s47, %s49
    %p56 = scmp.eq.s32.totalorder %s18, 3
    %p57 = por %p55, %p56
    %p58 = scmp.ne.s32.totalorder %s49, %s50
    %p59 = scmp.eq.s32.totalorder %s18, 0
    %p60 = por %p58, %p59
    %p61 = scmp.ne.s32.totalorder %s49, %s50
    %p62 = scmp.eq.s32.totalorder %s19, 3
    %p63 = por %p61, %p62
    %p65 = scmp.ne.s32.totalorder %s50, %s64
    %p66 = scmp.eq.s32.totalorder %s19, 0
    %p67 = por %p65, %p66
    %s69 = sadd.s32 %s68, 1
    %p72 = scmp.eq.s32.totalorder %s13, 3
    %p73 = scmp.ne.s32.totalorder %s68, %s70
    %p74 = scmp.eq.s32.totalorder %s13, 0
    %p75 = por %p73, %p74
    %p76 = scmp.ne.s32.totalorder %s68, %s70
    %p77 = scmp.eq.s32.totalorder %s18, 3
    %p78 = por %p76, %p77
    %p79 = scmp.ne.s32.totalorder %s70, %s71
    %p80 = scmp.eq.s32.totalorder %s18, 0
    %p81 = por %p79, %p80
    %p82 = scmp.ne.s32.totalorder %s70, %s71
    %p83 = scmp.eq.s32.totalorder %s19, 3
    %p84 = por %p82, %p83
    %p86 = scmp.ne.s32.totalorder %s71, %s85
    %p87 = scmp.eq.s32.totalorder %s19, 0
    %p88 = por %p86, %p87
    %s90 = sadd.s32 %s89, 1
    %p93 = scmp.eq.s32.totalorder %s13, 3
    %p94 = scmp.ne.s32.totalorder %s89, %s91
    %p95 = scmp.eq.s32.totalorder %s13, 0
    %p96 = por %p94, %p95
    %p97 = scmp.ne.s32.totalorder %s89, %s91
    %p98 = scmp.eq.s32.totalorder %s18, 3
    %p99 = por %p97, %p98
    %p100 = scmp.ne.s32.totalorder %s91, %s92
    %p101 = scmp.eq.s32.totalorder %s18, 0
    %p102 = por %p100, %p101
    %p103 = scmp.ne.s32.totalorder %s91, %s92
    %p104 = scmp.eq.s32.totalorder %s19, 3
    %p105 = por %p103, %p104
    %p107 = scmp.ne.s32.totalorder %s92, %s106
    %p108 = scmp.eq.s32.totalorder %s19, 0
    %p109 = por %p107, %p108
    %s111 = sadd.s32 %s110, 1
    %p114 = scmp.eq.s32.totalorder %s13, 3
    %p115 = scmp.ne.s32.totalorder %s110, %s112
    %p116 = scmp.eq.s32.totalorder %s13, 0
    %p117 = por %p115, %p116
    %p118 = scmp.ne.s32.totalorder %s110, %s112
    %p119 = scmp.eq.s32.totalorder %s18, 3
    %p120 = por %p118, %p119
    %p121 = scmp.ne.s32.totalorder %s112, %s113
    %p122 = scmp.eq.s32.totalorder %s18, 0
    %p123 = por %p121, %p122
    %p124 = scmp.ne.s32.totalorder %s112, %s113
    %p125 = scmp.eq.s32.totalorder %s19, 3
    %p126 = por %p124, %p125
    %p128 = scmp.ne.s32.totalorder %s113, %s127
    %p129 = scmp.eq.s32.totalorder %s19, 0
    %p130 = por %p128, %p129
    %s131 = ssub.s32 %s13, %s20
    %p132 = scmp.eq.s32.totalorder %s131, 0
    %s134 = sadd.s32 %s133, 1
    %s135 = scalar_select %p132, %s133, %s134
    %p138 = pneg %p132
    %p139 = scmp.eq.s32.totalorder %s13, 3
    %p140 = por %p138, %p139
    %p141 = scmp.ne.s32.totalorder %s133, %s136
    %p142 = scmp.eq.s32.totalorder %s13, 0
    %p143 = por %p141, %p142
    %p144 = scmp.ne.s32.totalorder %s133, %s136
    %p145 = scmp.eq.s32.totalorder %s18, 3
    %p146 = por %p144, %p145
    %p147 = scmp.ne.s32.totalorder %s136, %s137
    %p148 = scmp.eq.s32.totalorder %s18, 0
    %p149 = por %p147, %p148
    %p150 = scmp.ne.s32.totalorder %s136, %s137
    %p151 = scmp.eq.s32.totalorder %s19, 3
    %p152 = por %p150, %p151
    %p154 = scmp.ne.s32.totalorder %s137, %s153
    %p155 = scmp.eq.s32.totalorder %s19, 0
    %p156 = por %p154, %p155
    %s157 = ssub.s32 %s13, %s20
    %p158 = scmp.eq.s32.totalorder %s157, 0
    %s160 = sadd.s32 %s159, 1
    %s161 = scalar_select %p158, %s159, %s160
    %p164 = pneg %p158
    %p165 = scmp.eq.s32.totalorder %s13, 3
    %p166 = por %p164, %p165
    %p167 = scmp.ne.s32.totalorder %s159, %s162
    %p168 = scmp.eq.s32.totalorder %s13, 0
    %p169 = por %p167, %p168
    %p170 = scmp.ne.s32.totalorder %s159, %s162
    %p171 = scmp.eq.s32.totalorder %s18, 3
    %p172 = por %p170, %p171
    %p173 = scmp.ne.s32.totalorder %s162, %s163
    %p174 = scmp.eq.s32.totalorder %s18, 0
    %p175 = por %p173, %p174
    %p176 = scmp.ne.s32.totalorder %s162, %s163
    %p177 = scmp.eq.s32.totalorder %s19, 3
    %p178 = por %p176, %p177
    %p180 = scmp.ne.s32.totalorder %s163, %s179
    %p181 = scmp.eq.s32.totalorder %s19, 0
    %p182 = por %p180, %p181
    %p183 = scmp.le.s32.totalorder 1, %s13
    %p184 = scmp.lt.s32.totalorder %s13, 5
    %p185 = pnand %p183, %p184
    %p186 = pneg %p185
    // Predicated region
    $region9: #{residual_block.4} parent=5 // pred_check
      _
    $region10: #{residual_block.4} parent=5 // pred_check_branch
      %188 = sbr.rel (%p185) target = $region12
    $region11: #{residual_block.4} parent=5 // pred_region
      %s189 = ssub.s32 %s13, 1
      // Predicated region
      $region13: #{residual_block.4} parent=11 // pred_check
        %p190 = pneg %p60
      $region14: #{residual_block.4} parent=11 // pred_check_branch
        %192 = sbr.rel (%p190) target = $region16
      $region15: #{residual_block.4} parent=11 // pred_region
        _
      $region16: #{residual_block.4} parent=11 // pred_fallthru
        _
      // Predicated region
      $region17: #{residual_block.4} parent=11 // pred_check
        %p193 = pneg %p81
      $region18: #{residual_block.4} parent=11 // pred_check_branch
        %195 = sbr.rel (%p193) target = $region20
      $region19: #{residual_block.4} parent=11 // pred_region
        _
      $region20: #{residual_block.4} parent=11 // pred_fallthru
        _
      // Predicated region
      $region21: #{residual_block.4} parent=11 // pred_check
        %p196 = pneg %p102
      $region22: #{residual_block.4} parent=11 // pred_check_branch
        %198 = sbr.rel (%p196) target = $region24
      $region23: #{residual_block.4} parent=11 // pred_region
        _
      $region24: #{residual_block.4} parent=11 // pred_fallthru
        _
      // Predicated region
      $region25: #{residual_block.4} parent=11 // pred_check
        %p199 = pneg %p123
      $region26: #{residual_block.4} parent=11 // pred_check_branch
        %201 = sbr.rel (%p199) target = $region28
      $region27: #{residual_block.4} parent=11 // pred_region
        _
      $region28: #{residual_block.4} parent=11 // pred_fallthru
        _
    $region12: #{residual_block.4} parent=5 // pred_fallthru
      _
    %p202 = scmp.lt.s32.totalorder %s13, 4
    // Predicated region
    $region29: #{residual_block.4} parent=5 // pred_check
      %p203 = pneg %p202
    $region30: #{residual_block.4} parent=5 // pred_check_branch
      %205 = sbr.rel (%p203) target = $region32
    $region31: #{residual_block.4} parent=5 // pred_region
      // Predicated region
      $region33: #{residual_block.4} parent=31 // pred_check
        %p206 = pneg %p33
      $region34: #{residual_block.4} parent=31 // pred_check_branch
        %208 = sbr.rel (%p206) target = $region36
      $region35: #{residual_block.4} parent=31 // pred_region
        %p209 = scmp.lt.s32.totalorder %s13, 3
        %s210 = scalar_select %p209, %s13, 3
        %s211 = smul.addr %s210, 8
        %s212 = scalar_lea.vmem %s0, %s211
      $region36: #{residual_block.4} parent=31 // pred_fallthru
        _
    $region32: #{residual_block.4} parent=5 // pred_fallthru
      _
    %p213 = scmp.le.s32.totalorder 1, %s13
    %p214 = scmp.lt.s32.totalorder %s13, 5
    %p215 = pnand %p213, %p214
    %p216 = pneg %p215
    // Predicated region
    $region37: #{residual_block.4} parent=5 // pred_check
      _
    $region38: #{residual_block.4} parent=5 // pred_check_branch
      %218 = sbr.rel (%p215) target = $region40
    $region39: #{residual_block.4} parent=5 // pred_region
      %s219 = ssub.s32 %s13, 1
      %p220 = scmp.lt.s32.totalorder %s18, 3
      %s221 = scalar_select %p220, %s18, 3
      %s222 = smul.addr %s221, 8
      %s223 = scalar_lea.vmem %s0, %s222
      %p224 = pneg %p39
      %p225 = pneg %p36
      %p226 = pneg %p60
      %p227 = pneg %p57
      %p228 = pneg %p81
      %p229 = pneg %p78
      %p230 = pneg %p102
      %p231 = pneg %p99
      %p232 = pneg %p123
      %p233 = pneg %p120
      %p234 = pneg %p149
      %p235 = pneg %p146
      %p236 = scmp.lt.s32.totalorder %s18, 3
      %s237 = scalar_select %p236, %s18, 3
      %s238 = smul.addr %s237, 8
      %s239 = scalar_lea.vmem %s5, %s238
      %p240 = pneg %p175
      %p241 = pneg %p172
      %p242 = scmp.lt.s32.totalorder %s18, 3
      %s243 = scalar_select %p242, %s18, 3
      %s244 = smul.addr %s243, 2
      %s245 = scalar_lea.vmem %s6, %s244
      %p246 = scmp.lt.s32.totalorder %s18, 3
      %s247 = scalar_select %p246, %s18, 3
      %s248 = smul.addr %s247, 8
      %s249 = scalar_lea.vmem %s0, %s248
      %p250 = scmp.lt.s32.totalorder %s18, 3
      %s251 = scalar_select %p250, %s18, 3
      %s252 = smul.addr %s251, 8
      %s253 = scalar_lea.vmem %s5, %s252
      %p254 = scmp.lt.s32.totalorder %s18, 3
      %s255 = scalar_select %p254, %s18, 3
      %s256 = smul.addr %s255, 2
      %s257 = scalar_lea.vmem %s6, %s256
      %v258 = vld [vmem:[%s249] sm:$0xff]
      %v259 = vld [vmem:[%s1] sm:$0xff]
      %v260 = vld [vmem:[%s1 + $0x8] sm:$0xff]
      %v261 = vld [vmem:[%s1 + $0x10] sm:$0xff]
      %v262 = vld [vmem:[%s1 + $0x18] sm:$0xff]
      %v263 = vld [vmem:[%s1 + $0x20] sm:$0xff]
      %v264 = vld [vmem:[%s1 + $0x28] sm:$0xff]
      %v265 = vld [vmem:[%s1 + $0x30] sm:$0xff]
      %v266 = vld [vmem:[%s1 + $0x38] sm:$0xff]
      %vm267 = vcmask 523264
      %v269 = vsel %vm267, %v258, 0
      %271 = vmatprep.subr.mxu0 0.0
      %272 = vmatpush1.msra.mxu0 %v259
      %273 = vmatprep.subr.mxu0 0.0
      %274 = vmatpush1.msra.mxu0 %v260
      %275 = vmatprep.subr.mxu0 0.0
      %276 = vmatpush1.msra.mxu0 %v261
      %277 = vmatprep.subr.mxu0 0.0
      %278 = vmatpush1.msra.mxu0 %v262
      %279 = vmatprep.subr.mxu0 0.0
      %280 = vmatpush1.msra.mxu0 %v263
      %281 = vmatprep.subr.mxu0 0.0
      %282 = vmatpush1.msra.mxu0 %v264
      %283 = vmatprep.subr.mxu0 0.0
      %284 = vmatpush1.msra.mxu0 %v265
      %285 = vmatprep.subr.mxu0 0.0
      %286 = vmatpush1.msra.mxu0 %v266
      %287 = vmatprep.subr.mxu0 0.0
      %288 = vmatpush1.msra.mxu0 0.0
      %289 = vmatprep.subr.mxu0 0.0
      %290 = vmatpush1.msra.mxu0 0.0
      %291 = vmatprep.subr.mxu0 0.0
      %292 = vmatpush1.msra.mxu0 0.0
      %293 = vmatprep.subr.mxu0 0.0
      %294 = vmatpush1.msra.mxu0 0.0
      %295 = vmatprep.subr.mxu0 0.0
      %296 = vmatpush1.msra.mxu0 0.0
      %297 = vmatprep.subr.mxu0 0.0
      %298 = vmatpush1.msra.mxu0 0.0
      %299 = vmatprep.subr.mxu0 0.0
      %300 = vmatpush1.msra.mxu0 0.0
      %301 = vmatprep.subr.mxu0 0.0
      %302 = vmatpush1.msra.mxu0 0.0
      %303 = vmatprep.subr.mxu0 0.0
      %304 = vmatpush1.msra.mxu0 0.0
      %305 = vmatprep.subr.mxu0 0.0
      %306 = vmatpush1.msra.mxu0 0.0
      %307 = vmatprep.subr.mxu0 0.0
      %308 = vmatpush1.msra.mxu0 0.0
      %309 = vmatprep.subr.mxu0 0.0
      %310 = vmatpush1.msra.mxu0 0.0
      %311 = vmatprep.subr.mxu0 0.0
      %312 = vmatpush1.msra.mxu0 0.0
      %313 = vmatprep.subr.mxu0 0.0
      %314 = vmatpush1.msra.mxu0 0.0
      %315 = vmatprep.subr.mxu0 0.0
      %316 = vmatpush1.msra.mxu0 0.0
      %317 = vmatprep.subr.mxu0 0.0
      %318 = vmatpush1.msra.mxu0 0.0
      %319 = vmatprep.subr.mxu0 0.0
      %320 = vmatpush1.msra.mxu0 0.0
      %321 = vmatprep.subr.mxu0 0.0
      %322 = vmatpush1.msra.mxu0 0.0
      %323 = vmatprep.subr.mxu0 0.0
      %324 = vmatpush1.msra.mxu0 0.0
      %325 = vmatprep.subr.mxu0 0.0
      %326 = vmatpush1.msra.mxu0 0.0
      %327 = vmatprep.subr.mxu0 0.0
      %328 = vmatpush1.msra.mxu0 0.0
      %329 = vmatprep.subr.mxu0 0.0
      %330 = vmatpush1.msra.mxu0 0.0
      %331 = vmatprep.subr.mxu0 0.0
      %332 = vmatpush1.msra.mxu0 0.0
      %333 = vmatprep.subr.mxu0 0.0
      %334 = vmatpush1.msra.mxu0 0.0
      %335 = vmatprep.mubr.f32.mxu0 0.0
      %336 = vmatmul.mubr.f32.gmra.mrb[0].mxu0 %v269
      %v337 = vpop.f32.mrb[0].mxu0
      %v338 = vadd.f32 0.0, %v337
      %v339 = vpop.f32.mrb[0].mxu0
      %340 = vdwg.mxu0
      %v341 = vld [vmem:[%s2] sm:$0x1]
      %v343 = vlaneseq
      %v344 = vshrl.u32 %v343, 7
      %v345 = vsub.s32 0, %v344
      %v346 = vrot.slane %v341, %v345
      %v348 = vmul.f32 %v338, %v346
      %v349 = vld [vmem:[%s3] sm:$0x1]
      %v351 = vlaneseq
      %v352 = vshrl.u32 %v351, 7
      %v353 = vsub.s32 0, %v352
      %v354 = vrot.slane %v349, %v353
      %v356 = vadd.f32 %v348, %v354
      %vm357 = vcmp.gt.f32.partialorder %v356, 0.0
      %v358 = vmin.f32 %v356, 0.0
      %v359 = vmul.f32 %v358, 1.442695
      %v360 = vpow.pop %v359
      %v361 = vsub.f32 %v360, 1.0
      %v362 = vsel %vm357, %v356, %v361
      %v363 = vld [vmem:[%s4] sm:$0xff]
      %v364 = vld [vmem:[%s4 + $0x8] sm:$0xff]
      %v365 = vld [vmem:[%s4 + $0x10] sm:$0xff]
      %v366 = vld [vmem:[%s4 + $0x18] sm:$0xff]
      %v367 = vld [vmem:[%s4 + $0x20] sm:$0xff]
      %v368 = vld [vmem:[%s4 + $0x28] sm:$0xff]
      %v369 = vld [vmem:[%s4 + $0x30] sm:$0xff]
      %v370 = vld [vmem:[%s4 + $0x38] sm:$0xff]
      %v371 = vld [vmem:[%s4 + $0x40] sm:$0xff]
      %v372 = vld [vmem:[%s4 + $0x48] sm:$0xff]
      %v373 = vld [vmem:[%s4 + $0x50] sm:$0xff]
      %v374 = vld [vmem:[%s4 + $0x58] sm:$0xff]
      %v375 = vld [vmem:[%s4 + $0x60] sm:$0xff]
      %v376 = vld [vmem:[%s4 + $0x68] sm:$0xff]
      %v377 = vld [vmem:[%s4 + $0x70] sm:$0xff]
      %v378 = vld [vmem:[%s4 + $0x78] sm:$0xff]
      %379 = vmatprep.subr.mxu0 0.0
      %380 = vmatpush1.msra.mxu0 %v363
      %381 = vmatprep.subr.mxu0 0.0
      %382 = vmatpush1.msra.mxu0 %v364
      %383 = vmatprep.subr.mxu0 0.0
      %384 = vmatpush1.msra.mxu0 %v365
      %385 = vmatprep.subr.mxu0 0.0
      %386 = vmatpush1.msra.mxu0 %v366
      %387 = vmatprep.subr.mxu0 0.0
      %388 = vmatpush1.msra.mxu0 %v367
      %389 = vmatprep.subr.mxu0 0.0
      %390 = vmatpush1.msra.mxu0 %v368
      %391 = vmatprep.subr.mxu0 0.0
      %392 = vmatpush1.msra.mxu0 %v369
      %393 = vmatprep.subr.mxu0 0.0
      %394 = vmatpush1.msra.mxu0 %v370
      %395 = vmatprep.subr.mxu0 0.0
      %396 = vmatpush1.msra.mxu0 %v371
      %397 = vmatprep.subr.mxu0 0.0
      %398 = vmatpush1.msra.mxu0 %v372
      %399 = vmatprep.subr.mxu0 0.0
      %400 = vmatpush1.msra.mxu0 %v373
      %401 = vmatprep.subr.mxu0 0.0
      %402 = vmatpush1.msra.mxu0 %v374
      %403 = vmatprep.subr.mxu0 0.0
      %404 = vmatpush1.msra.mxu0 %v375
      %405 = vmatprep.subr.mxu0 0.0
      %406 = vmatpush1.msra.mxu0 %v376
      %407 = vmatprep.subr.mxu0 0.0
      %408 = vmatpush1.msra.mxu0 %v377
      %409 = vmatprep.subr.mxu0 0.0
      %410 = vmatpush1.msra.mxu0 %v378
      %411 = vmatprep.subr.mxu0 0.0
      %412 = vmatpush1.msra.mxu0 0.0
      %413 = vmatprep.subr.mxu0 0.0
      %414 = vmatpush1.msra.mxu0 0.0
      %415 = vmatprep.subr.mxu0 0.0
      %416 = vmatpush1.msra.mxu0 0.0
      %417 = vmatprep.subr.mxu0 0.0
      %418 = vmatpush1.msra.mxu0 0.0
      %419 = vmatprep.subr.mxu0 0.0
      %420 = vmatpush1.msra.mxu0 0.0
      %421 = vmatprep.subr.mxu0 0.0
      %422 = vmatpush1.msra.mxu0 0.0
      %423 = vmatprep.subr.mxu0 0.0
      %424 = vmatpush1.msra.mxu0 0.0
      %425 = vmatprep.subr.mxu0 0.0
      %426 = vmatpush1.msra.mxu0 0.0
      %427 = vmatprep.subr.mxu0 0.0
      %428 = vmatpush1.msra.mxu0 0.0
      %429 = vmatprep.subr.mxu0 0.0
      %430 = vmatpush1.msra.mxu0 0.0
      %431 = vmatprep.subr.mxu0 0.0
      %432 = vmatpush1.msra.mxu0 0.0
      %433 = vmatprep.subr.mxu0 0.0
      %434 = vmatpush1.msra.mxu0 0.0
      %435 = vmatprep.subr.mxu0 0.0
      %436 = vmatpush1.msra.mxu0 0.0
      %437 = vmatprep.subr.mxu0 0.0
      %438 = vmatpush1.msra.mxu0 0.0
      %439 = vmatprep.subr.mxu0 0.0
      %440 = vmatpush1.msra.mxu0 0.0
      %441 = vmatprep.subr.mxu0 0.0
      %442 = vmatpush1.msra.mxu0 0.0
      %443 = vmatprep.mubr.f32.mxu0 0.0
      %444 = vmatmul.mubr.f32.gmra.mrb[0].mxu0 %v362
      %v445 = vpop.f32.mrb[0].mxu0
      %v446 = vadd.f32 0.0, %v445
      %v447 = vpop.f32.mrb[0].mxu0
      %448 = vdwg.mxu0
      %449 = vst [vmem:[%s253] sm:$0xff] %v446
      %v450 = vrot.slane %v446, 4
      %v451 = vadd.f32 %v446, %v450
      %v452 = vrot.slane %v451, 2
      %v453 = vadd.f32 %v451, %v452
      %v454 = vrot.slane %v453, 1
      %v455 = vadd.f32 %v453, %v454
      %v456 = vmul.f32 %v446, %v446
      %v457 = vrot.slane %v456, 4
      %v458 = vadd.f32 %v456, %v457
      %v459 = vrot.slane %v458, 2
      %v460 = vadd.f32 %v458, %v459
      %v461 = vrot.slane %v460, 1
      %v462 = vadd.f32 %v460, %v461
      %vm463 = vcmask 1040384
      %v464 = vsel %vm463, %v455, %v462
      %465 = vst [vmem:[%s257] sm:$0x3] %v464
      %p466 = scmp.lt.s32.totalorder %s18, 3
      %s467 = scalar_select %p466, %s18, 3
      %s468 = smul.addr %s467, 8
      %s469 = scalar_lea.vmem %s5, %s468
      %p470 = scmp.lt.s32.totalorder %s18, 3
      %s471 = scalar_select %p470, %s18, 3
      %s472 = smul.addr %s471, 2
      %s473 = scalar_lea.vmem %s6, %s472
      // Predicated region
      $region41: #{residual_block.4} parent=39 // pred_check
        %p474 = pneg %p146
      $region42: #{residual_block.4} parent=39 // pred_check_branch
        %476 = sbr.rel (%p474) target = $region44
      $region43: #{residual_block.4} parent=39 // pred_region
        _
      $region44: #{residual_block.4} parent=39 // pred_fallthru
        _
      // Predicated region
      $region45: #{residual_block.4} parent=39 // pred_check
        %p477 = pneg %p172
      $region46: #{residual_block.4} parent=39 // pred_check_branch
        %479 = sbr.rel (%p477) target = $region48
      $region47: #{residual_block.4} parent=39 // pred_region
        _
      $region48: #{residual_block.4} parent=39 // pred_fallthru
        _
    $region40: #{residual_block.4} parent=5 // pred_fallthru
      _
    %p480 = scmp.le.s32.totalorder 2, %s13
    // Predicated region
    $region49: #{residual_block.4} parent=5 // pred_check
      %p481 = pneg %p480
    $region50: #{residual_block.4} parent=5 // pred_check_branch
      %483 = sbr.rel (%p481) target = $region52
    $region51: #{residual_block.4} parent=5 // pred_region
      %s484 = ssub.s32 %s13, 2
      // Predicated region
      $region53: #{residual_block.4} parent=51 // pred_check
        %p485 = pneg %p152
      $region54: #{residual_block.4} parent=51 // pred_check_branch
        %487 = sbr.rel (%p485) target = $region56
      $region55: #{residual_block.4} parent=51 // pred_region
        %p488 = scmp.lt.s32.totalorder %s19, 3
        %s489 = scalar_select %p488, %s19, 3
        %s490 = smul.addr %s489, 8
        %s491 = scalar_lea.vmem %s5, %s490
      $region56: #{residual_block.4} parent=51 // pred_fallthru
        _
      // Predicated region
      $region57: #{residual_block.4} parent=51 // pred_check
        %p492 = pneg %p178
      $region58: #{residual_block.4} parent=51 // pred_check_branch
        %494 = sbr.rel (%p492) target = $region60
      $region59: #{residual_block.4} parent=51 // pred_region
        %p495 = scmp.lt.s32.totalorder %s19, 3
        %s496 = scalar_select %p495, %s19, 3
        %s497 = smul.addr %s496, 2
        %s498 = scalar_lea.vmem %s6, %s497
      $region60: #{residual_block.4} parent=51 // pred_fallthru
        _
    $region52: #{residual_block.4} parent=5 // pred_fallthru
      _
  $region6: #{residual_block.4} parent=0 // loop_footer
    %s17 = sadd.s32 1, %s13
  $region7: #{residual_block.4} parent=0 // loop_footer_branch
    %12 = sbr.rel target = $region3
  $region8: #{residual_block.4} parent=0 // loop_exit
    _

</llo_original>
